<compile_context>
chip_gen: v5e
topology: v5e:2x2
jax: 0.10.0
libtpu: 0.0.40
codegen_flags: <defaults>
</compile_context>

<pallas_src>
import jax
import jax.numpy as jnp
from jax.experimental import pallas as pl
from jax.experimental.pallas import tpu as pltpu

KH = KW = 3  # 3x3 conv, padding=1, stride=1 (shape preserving, as Residual requires)


def _make_kernel(th, w, c):
    """Fused conv3x3 + folded-BN + ReLU + residual for one (1, th, w, c) row tile."""

    def kernel(x_ref, top_ref, bot_ref, w_ref, scale_ref, bias_ref, o_ref, xsh_s):
        # x_ref   : (1, th, w, c)   bf16 row tile (also provides the residual term)
        # top_ref : (1, 1,  w, c)   bf16 row just above the tile (clamped at border)
        # bot_ref : (1, 1,  w, c)   bf16 row just below the tile (clamped at border)
        # w_ref   : (9*c, c)        bf16 conv taps, row index = (dy*3 + dx)*c + cin
        # scale_ref, bias_ref : (1, c) f32 folded BatchNorm affine
        # o_ref   : (1, th, w, c)   bf16 output tile
        # xsh_s   : (th+2, w, 3*c)  bf16 scratch: dx-concatenated, row-padded slab
        #           xsh_s[r, j, dx*c:(dx+1)*c] = x[tile_start + r - 1, j + dx - 1, :]
        #           with out-of-image positions zero.
        t = pl.program_id(1)
        n_t = pl.num_programs(1)

        # --- build the slab: zero only the pad border, copy everything else once ---
        zcol = jnp.zeros((th + 2, 1, c), jnp.bfloat16)
        xsh_s[:, 0:1, 0:c] = zcol                      # left pad column (dx = 0 copy)
        xsh_s[:, w - 1:w, 2 * c:3 * c] = zcol          # right pad column (dx = 2 copy)

        # interior rows (ref slices only; no full-tile value kept live)
        xsh_s[1:th + 1, :, c:2 * c] = x_ref[0]                         # dx = 1
        xsh_s[1:th + 1, 1:w, 0:c] = x_ref[0, :, 0:w - 1, :]            # dx = 0
        xsh_s[1:th + 1, 0:w - 1, 2 * c:3 * c] = x_ref[0, :, 1:w, :]    # dx = 2

        # top halo row (slab row 0): zero at the image border, else the row above
        @pl.when(t == 0)
        def _():
            xsh_s[0:1, :, :] = jnp.zeros((1, w, 3 * c), jnp.bfloat16)

        @pl.when(t > 0)
        def _():
            xsh_s[0:1, :, c:2 * c] = top_ref[0]
            xsh_s[0:1, 1:w, 0:c] = top_ref[0, :, 0:w - 1, :]
            xsh_s[0:1, 0:w - 1, 2 * c:3 * c] = top_ref[0, :, 1:w, :]

        # bottom halo row (slab row th+1)
        @pl.when(t == n_t - 1)
        def _():
            xsh_s[th + 1:th + 2, :, :] = jnp.zeros((1, w, 3 * c), jnp.bfloat16)

        @pl.when(t < n_t - 1)
        def _():
            xsh_s[th + 1:th + 2, :, c:2 * c] = bot_ref[0]
            xsh_s[th + 1:th + 2, 1:w, 0:c] = bot_ref[0, :, 0:w - 1, :]
            xsh_s[th + 1:th + 2, 0:w - 1, 2 * c:3 * c] = bot_ref[0, :, 1:w, :]

        # --- conv: 3 accumulating K=3c matmuls over zero-copy dy row-slices -------
        # weight rows for dy live at [dy*3c : (dy+1)*3c] with inner order dx*c + cin,
        # which matches the slab's dx-concatenated channel layout.
        acc = jnp.dot(xsh_s[0:th].reshape(th * w, 3 * c), w_ref[0:3 * c, :],
                      preferred_element_type=jnp.float32)
        acc += jnp.dot(xsh_s[1:th + 1].reshape(th * w, 3 * c), w_ref[3 * c:6 * c, :],
                       preferred_element_type=jnp.float32)
        acc += jnp.dot(xsh_s[2:th + 2].reshape(th * w, 3 * c), w_ref[6 * c:9 * c, :],
                       preferred_element_type=jnp.float32)

        # --- f32 epilogue: folded BN, ReLU, residual add; bf16 writeback ----------
        y = jnp.maximum(acc * scale_ref[...] + bias_ref[...], 0.0)
        res = x_ref[0].astype(jnp.float32).reshape(th * w, c) + y
        o_ref[0] = res.astype(o_ref.dtype).reshape(th, w, c)

    return kernel


def _vmem_limit_bytes():
    """Scoped-VMEM limit for the pallas_call: half the physical per-core VMEM
    (128 MiB on v5e/v6e -> 64 MiB, 64 MiB per TC on v7x -> 32 MiB); 32 MiB if the
    hardware query is unavailable."""
    try:
        cap = getattr(pltpu.get_tpu_info(), "vmem_capacity_bytes", None)
    except Exception:
        cap = None
    if not cap:
        cap = 64 << 20          # conservative default: v7x per-TensorCore VMEM
    return int(min(cap // 2, 64 << 20))


def _pick_row_tile(n, h, w, c, out_bytes, vmem_limit):
    """Largest row tile th (dividing H) whose double-buffered streams + scratch fit
    inside the scoped-VMEM limit with headroom, while keeping >= 4 grid programs
    so the pipeline and both v7x TensorCores have work."""

    def footprint(th):
        return (2 * th * w * c * 2             # x row tile, bf16, double-buffered
                + 2 * 2 * w * c * 2            # two 1-row halo streams, double-buffered
                + 2 * th * w * c * out_bytes   # output tile, double-buffered
                + 2 * KH * KW * c * c * 2      # conv taps (both pipeline buffers)
                + 2 * 2 * c * 4                # BN scale / bias
                + (th + 2) * w * 3 * c * 2     # dx-concatenated slab scratch
                + th * w * c * 4)              # f32 accumulator / epilogue staging

    budget = (vmem_limit * 3) // 4             # headroom for compiler temporaries
    min_progs = min(4, n * h)
    for th in range(h, 0, -1):
        if h % th == 0 and footprint(th) <= budget and n * (h // th) >= min_progs:
            return th
    return 1


def residual_forward(x_nchw, w_oihw, gamma, beta, running_mean, running_var,
                     eps=1e-5, row_tile=None):
    """x + ReLU(BN(Conv3x3(x))), matching PyTorch NCHW semantics."""
    N, C, H, W = x_nchw.shape
    out_dtype = x_nchw.dtype

    # NCHW -> NHWC (channels on the lane axis); bf16 conv / residual operands.
    x = jnp.transpose(x_nchw, (0, 2, 3, 1)).astype(jnp.bfloat16)

    # (Cout, Cin, 3, 3) -> (ky, kx, Cin, Cout) -> (9*Cin, Cout), row order
    # (dy*3 + dx)*Cin + cin matching the kernel's dx-concatenated slab.
    w = jnp.transpose(w_oihw, (2, 3, 1, 0)).reshape(KH * KW * C, C).astype(jnp.bfloat16)

    # Fold inference BatchNorm into per-channel scale / bias (kept in f32).
    scale = (gamma / jnp.sqrt(running_var + eps)).astype(jnp.float32)
    bias = beta.astype(jnp.float32) - running_mean.astype(jnp.float32) * scale
    scale = scale.reshape(1, C)
    bias = bias.reshape(1, C)

    store_dtype = jnp.bfloat16        # bf16 writeback: ~2x less HBM than f32 output
    vmem_limit = _vmem_limit_bytes()
    th = row_tile if row_tile is not None else _pick_row_tile(
        N, H, W, C, jnp.dtype(store_dtype).itemsize, vmem_limit)
    assert H % th == 0, (H, th)
    n_row_tiles = H // th

    kernel = _make_kernel(th, W, C)

    out = pl.pallas_call(
        kernel,
        out_shape=jax.ShapeDtypeStruct((N, H, W, C), store_dtype),
        grid_spec=pltpu.PrefetchScalarGridSpec(
            num_scalar_prefetch=0,
            grid=(N, n_row_tiles),
            in_specs=[
                # main row tile: the only full shipment of x
                pl.BlockSpec((1, th, W, C), lambda n, t: (n, t, 0, 0)),
                # 1-row halos above / below the tile (block size 1 => element row
                # index); clamped at the border and zero-masked in the kernel.
                pl.BlockSpec((1, 1, W, C),
                             lambda n, t: (n, jnp.maximum(t * th - 1, 0), 0, 0)),
                pl.BlockSpec((1, 1, W, C),
                             lambda n, t: (n, jnp.minimum(t * th + th, H - 1), 0, 0)),
                # constant-index blocks (conv taps, BN affine)
                pl.BlockSpec((KH * KW * C, C), lambda n, t: (0, 0)),
                pl.BlockSpec((1, C), lambda n, t: (0, 0)),
                pl.BlockSpec((1, C), lambda n, t: (0, 0)),
            ],
            out_specs=pl.BlockSpec((1, th, W, C), lambda n, t: (n, t, 0, 0)),
            scratch_shapes=[
                pltpu.VMEM((th + 2, W, 3 * C), jnp.bfloat16),   # dx-concatenated slab
            ],
        ),
        compiler_params=pltpu.CompilerParams(
            dimension_semantics=("parallel", "parallel"),
            vmem_limit_bytes=vmem_limit,
        ),
    )(x, x, x, w, scale, bias)

    # NHWC bf16 -> NCHW in the caller's dtype (one fused transpose+convert; both
    # disappear when this layer sits inside an NHWC bf16 pipeline).
    return jnp.transpose(out, (0, 3, 1, 2)).astype(out_dtype)


def reference(x_nchw, w_oihw, gamma, beta, mean, var, eps=1e-5):
    """Pure-JAX f32 reference of x + ReLU(BN(Conv3x3(x))) in NCHW."""
    y = jax.lax.conv_general_dilated(
        x_nchw, w_oihw, window_strides=(1, 1), padding=((1, 1), (1, 1)),
        dimension_numbers=("NCHW", "OIHW", "NCHW"))
    scale = gamma / jnp.sqrt(var + eps)
    bias = beta - mean * scale
    y = y * scale[None, :, None, None] + bias[None, :, None, None]
    y = jnp.maximum(y, 0.0)
    return x_nchw + y


if __name__ == "__main__":
    key = jax.random.PRNGKey(0)
    kx, kw, kg, kb, km, kv = jax.random.split(key, 6)

    N, C, H, W = 2, 4, 16, 16
    x = jax.random.normal(kx, (N, C, H, W), jnp.float32)

    # Deterministic synthetic parameters for the wrapped conv_bn module.
    w_conv = 0.1 * jax.random.normal(kw, (C, C, KH, KW), jnp.float32)   # OIHW
    gamma = 1.0 + 0.1 * jax.random.normal(kg, (C,), jnp.float32)
    beta = 0.1 * jax.random.normal(kb, (C,), jnp.float32)
    running_mean = 0.1 * jax.random.normal(km, (C,), jnp.float32)
    running_var = jax.random.uniform(kv, (C,), jnp.float32, 0.5, 1.5)

    out = residual_forward(x, w_conv, gamma, beta, running_mean, running_var)
    out = jax.block_until_ready(out)

    ref = reference(x, w_conv, gamma, beta, running_mean, running_var)
    assert out.shape == x.shape and out.dtype == x.dtype
    # bf16 matmul operands + bf16 writeback => ~1e-2-level error vs the f32 reference.
    assert jnp.allclose(out, ref, atol=3e-2, rtol=3e-2), float(
        jnp.max(jnp.abs(out - ref)))
    print("KERNEL_OK")
</pallas_src>

<mosaic_0001>
module attributes {stable_mosaic.version = 11 : i64} {
  func.func @kernel(%arg0: i32, %arg1: i32, %arg2: memref<1x8x16x4xbf16, #tpu.memory_space<vmem>>, %arg3: memref<1x1x16x4xbf16, #tpu.memory_space<vmem>>, %arg4: memref<1x1x16x4xbf16, #tpu.memory_space<vmem>>, %arg5: memref<36x4xbf16, #tpu.memory_space<vmem>>, %arg6: memref<1x4xf32, #tpu.memory_space<vmem>>, %arg7: memref<1x4xf32, #tpu.memory_space<vmem>>, %arg8: memref<1x8x16x4xbf16, #tpu.memory_space<vmem>>, %arg9: memref<10x16x12xbf16, #tpu.memory_space<vmem>>) attributes {dimension_semantics = [#tpu.dimension_semantics<parallel>, #tpu.dimension_semantics<parallel>], iteration_bounds = array<i64: 2, 2>, scalar_prefetch = 0 : i64, scratch_operands = 1 : i64, tpu.core_type = #tpu.core_type<tc>, window_params = [{transform_indices = @transform_0, window_bounds = array<i64: 1, 8, 16, 4>}, {transform_indices = @transform_1, window_bounds = array<i64: 1, 1, 16, 4>}, {transform_indices = @transform_2, window_bounds = array<i64: 1, 1, 16, 4>}, {pipeline_mode = #tpu.pipeline_mode<synchronous>, transform_indices = @transform_3, window_bounds = array<i64: 36, 4>}, {pipeline_mode = #tpu.pipeline_mode<synchronous>, transform_indices = @transform_4, window_bounds = array<i64: 1, 4>}, {pipeline_mode = #tpu.pipeline_mode<synchronous>, transform_indices = @transform_5, window_bounds = array<i64: 1, 4>}, {transform_indices = @transform_6, window_bounds = array<i64: 1, 8, 16, 4>}]} {
    %cst = arith.constant 0.000000e+00 : bf16
    %0 = vector.broadcast %cst : bf16 to vector<10x1x4xbf16>
    %c0 = arith.constant 0 : index
    %c0_0 = arith.constant 0 : index
    %c0_1 = arith.constant 0 : index
    %1 = vector.load %arg9[%c0, %c0_0, %c0_1] : memref<10x16x12xbf16, #tpu.memory_space<vmem>>, vector<10x1x4xbf16>
    tpu.vector_store %arg9[%c0, %c0_0, %c0_1], %0 {strides = array<i32>} : memref<10x16x12xbf16, #tpu.memory_space<vmem>>, vector<10x1x4xbf16>,
    %c0_2 = arith.constant 0 : index
    %c15 = arith.constant 15 : index
    %c8 = arith.constant 8 : index
    %2 = vector.load %arg9[%c0_2, %c15, %c8] : memref<10x16x12xbf16, #tpu.memory_space<vmem>>, vector<10x1x4xbf16>
    tpu.vector_store %arg9[%c0_2, %c15, %c8], %0 {strides = array<i32>} : memref<10x16x12xbf16, #tpu.memory_space<vmem>>, vector<10x1x4xbf16>,
    %c0_3 = arith.constant 0 : index
    %c0_4 = arith.constant 0 : index
    %c0_5 = arith.constant 0 : index
    %c0_6 = arith.constant 0 : index
    %3 = vector.load %arg2[%c0_3, %c0_4, %c0_5, %c0_6] : memref<1x8x16x4xbf16, #tpu.memory_space<vmem>>, vector<1x8x16x4xbf16>
    %4 = vector.shape_cast %3 : vector<1x8x16x4xbf16> to vector<8x16x4xbf16>
    %c1 = arith.constant 1 : index
    %c0_7 = arith.constant 0 : index
    %c4 = arith.constant 4 : index
    %5 = vector.load %arg9[%c1, %c0_7, %c4] : memref<10x16x12xbf16, #tpu.memory_space<vmem>>, vector<8x16x4xbf16>
    tpu.vector_store %arg9[%c1, %c0_7, %c4], %4 {strides = array<i32>} : memref<10x16x12xbf16, #tpu.memory_space<vmem>>, vector<8x16x4xbf16>,
    %c0_8 = arith.constant 0 : index
    %c0_9 = arith.constant 0 : index
    %c0_10 = arith.constant 0 : index
    %c0_11 = arith.constant 0 : index
    %6 = vector.load %arg2[%c0_8, %c0_9, %c0_10, %c0_11] : memref<1x8x16x4xbf16, #tpu.memory_space<vmem>>, vector<1x8x15x4xbf16>
    %7 = vector.shape_cast %6 : vector<1x8x15x4xbf16> to vector<8x15x4xbf16>
    %c1_12 = arith.constant 1 : index
    %c1_13 = arith.constant 1 : index
    %c0_14 = arith.constant 0 : index
    %8 = vector.load %arg9[%c1_12, %c1_13, %c0_14] : memref<10x16x12xbf16, #tpu.memory_space<vmem>>, vector<8x15x4xbf16>
    tpu.vector_store %arg9[%c1_12, %c1_13, %c0_14], %7 {strides = array<i32>} : memref<10x16x12xbf16, #tpu.memory_space<vmem>>, vector<8x15x4xbf16>,
    %c0_15 = arith.constant 0 : index
    %c0_16 = arith.constant 0 : index
    %c1_17 = arith.constant 1 : index
    %c0_18 = arith.constant 0 : index
    %9 = vector.load %arg2[%c0_15, %c0_16, %c1_17, %c0_18] : memref<1x8x16x4xbf16, #tpu.memory_space<vmem>>, vector<1x8x15x4xbf16>
    %10 = vector.shape_cast %9 : vector<1x8x15x4xbf16> to vector<8x15x4xbf16>
    %c1_19 = arith.constant 1 : index
    %c0_20 = arith.constant 0 : index
    %c8_21 = arith.constant 8 : index
    %11 = vector.load %arg9[%c1_19, %c0_20, %c8_21] : memref<10x16x12xbf16, #tpu.memory_space<vmem>>, vector<8x15x4xbf16>
    tpu.vector_store %arg9[%c1_19, %c0_20, %c8_21], %10 {strides = array<i32>} : memref<10x16x12xbf16, #tpu.memory_space<vmem>>, vector<8x15x4xbf16>,
    %c0_i32 = arith.constant 0 : i32
    %12 = arith.cmpi eq, %arg1, %c0_i32 : i32
    %13 = arith.extui %12 : i1 to i32
    %c0_i32_22 = arith.constant 0 : i32
    %14 = arith.cmpi ne, %13, %c0_i32_22 : i32
    scf.if %14 {
      %cst_56 = arith.constant 0.000000e+00 : bf16
      %56 = vector.broadcast %cst_56 : bf16 to vector<1x16x12xbf16>
      %c0_57 = arith.constant 0 : index
      %c0_58 = arith.constant 0 : index
      %c0_59 = arith.constant 0 : index
      %57 = vector.load %arg9[%c0_57, %c0_58, %c0_59] : memref<10x16x12xbf16, #tpu.memory_space<vmem>>, vector<1x16x12xbf16>
      tpu.vector_store %arg9[%c0_57, %c0_58, %c0_59], %56 {strides = array<i32>} : memref<10x16x12xbf16, #tpu.memory_space<vmem>>, vector<1x16x12xbf16>,
    } else {
    }
    %c0_i32_23 = arith.constant 0 : i32
    %15 = arith.cmpi sgt, %arg1, %c0_i32_23 : i32
    %16 = arith.extui %15 : i1 to i32
    %c0_i32_24 = arith.constant 0 : i32
    %17 = arith.cmpi ne, %16, %c0_i32_24 : i32
    scf.if %17 {
      %c0_56 = arith.constant 0 : index
      %c0_57 = arith.constant 0 : index
      %c0_58 = arith.constant 0 : index
      %c0_59 = arith.constant 0 : index
      %56 = vector.load %arg3[%c0_56, %c0_57, %c0_58, %c0_59] : memref<1x1x16x4xbf16, #tpu.memory_space<vmem>>, vector<1x1x16x4xbf16>
      %57 = vector.shape_cast %56 : vector<1x1x16x4xbf16> to vector<1x16x4xbf16>
      %c0_60 = arith.constant 0 : index
      %c0_61 = arith.constant 0 : index
      %c4_62 = arith.constant 4 : index
      %58 = vector.load %arg9[%c0_60, %c0_61, %c4_62] : memref<10x16x12xbf16, #tpu.memory_space<vmem>>, vector<1x16x4xbf16>
      tpu.vector_store %arg9[%c0_60, %c0_61, %c4_62], %57 {strides = array<i32>} : memref<10x16x12xbf16, #tpu.memory_space<vmem>>, vector<1x16x4xbf16>,
      %c0_63 = arith.constant 0 : index
      %c0_64 = arith.constant 0 : index
      %c0_65 = arith.constant 0 : index
      %c0_66 = arith.constant 0 : index
      %59 = vector.load %arg3[%c0_63, %c0_64, %c0_65, %c0_66] : memref<1x1x16x4xbf16, #tpu.memory_space<vmem>>, vector<1x1x15x4xbf16>
      %60 = vector.shape_cast %59 : vector<1x1x15x4xbf16> to vector<1x15x4xbf16>
      %c0_67 = arith.constant 0 : index
      %c1_68 = arith.constant 1 : index
      %c0_69 = arith.constant 0 : index
      %61 = vector.load %arg9[%c0_67, %c1_68, %c0_69] : memref<10x16x12xbf16, #tpu.memory_space<vmem>>, vector<1x15x4xbf16>
      tpu.vector_store %arg9[%c0_67, %c1_68, %c0_69], %60 {strides = array<i32>} : memref<10x16x12xbf16, #tpu.memory_space<vmem>>, vector<1x15x4xbf16>,
      %c0_70 = arith.constant 0 : index
      %c0_71 = arith.constant 0 : index
      %c1_72 = arith.constant 1 : index
      %c0_73 = arith.constant 0 : index
      %62 = vector.load %arg3[%c0_70, %c0_71, %c1_72, %c0_73] : memref<1x1x16x4xbf16, #tpu.memory_space<vmem>>, vector<1x1x15x4xbf16>
      %63 = vector.shape_cast %62 : vector<1x1x15x4xbf16> to vector<1x15x4xbf16>
      %c0_74 = arith.constant 0 : index
      %c0_75 = arith.constant 0 : index
      %c8_76 = arith.constant 8 : index
      %64 = vector.load %arg9[%c0_74, %c0_75, %c8_76] : memref<10x16x12xbf16, #tpu.memory_space<vmem>>, vector<1x15x4xbf16>
      tpu.vector_store %arg9[%c0_74, %c0_75, %c8_76], %63 {strides = array<i32>} : memref<10x16x12xbf16, #tpu.memory_space<vmem>>, vector<1x15x4xbf16>,
    } else {
    }
    %c1_i32 = arith.constant 1 : i32
    %18 = arith.cmpi eq, %arg1, %c1_i32 : i32
    %19 = arith.extui %18 : i1 to i32
    %c0_i32_25 = arith.constant 0 : i32
    %20 = arith.cmpi ne, %19, %c0_i32_25 : i32
    scf.if %20 {
      %cst_56 = arith.constant 0.000000e+00 : bf16
      %56 = vector.broadcast %cst_56 : bf16 to vector<1x16x12xbf16>
      %c9 = arith.constant 9 : index
      %c0_57 = arith.constant 0 : index
      %c0_58 = arith.constant 0 : index
      %57 = vector.load %arg9[%c9, %c0_57, %c0_58] : memref<10x16x12xbf16, #tpu.memory_space<vmem>>, vector<1x16x12xbf16>
      tpu.vector_store %arg9[%c9, %c0_57, %c0_58], %56 {strides = array<i32>} : memref<10x16x12xbf16, #tpu.memory_space<vmem>>, vector<1x16x12xbf16>,
    } else {
    }
    %c1_i32_26 = arith.constant 1 : i32
    %21 = arith.cmpi slt, %arg1, %c1_i32_26 : i32
    %22 = arith.extui %21 : i1 to i32
    %c0_i32_27 = arith.constant 0 : i32
    %23 = arith.cmpi ne, %22, %c0_i32_27 : i32
    scf.if %23 {
      %c0_56 = arith.constant 0 : index
      %c0_57 = arith.constant 0 : index
      %c0_58 = arith.constant 0 : index
      %c0_59 = arith.constant 0 : index
      %56 = vector.load %arg4[%c0_56, %c0_57, %c0_58, %c0_59] : memref<1x1x16x4xbf16, #tpu.memory_space<vmem>>, vector<1x1x16x4xbf16>
      %57 = vector.shape_cast %56 : vector<1x1x16x4xbf16> to vector<1x16x4xbf16>
      %c9 = arith.constant 9 : index
      %c0_60 = arith.constant 0 : index
      %c4_61 = arith.constant 4 : index
      %58 = vector.load %arg9[%c9, %c0_60, %c4_61] : memref<10x16x12xbf16, #tpu.memory_space<vmem>>, vector<1x16x4xbf16>
      tpu.vector_store %arg9[%c9, %c0_60, %c4_61], %57 {strides = array<i32>} : memref<10x16x12xbf16, #tpu.memory_space<vmem>>, vector<1x16x4xbf16>,
      %c0_62 = arith.constant 0 : index
      %c0_63 = arith.constant 0 : index
      %c0_64 = arith.constant 0 : index
      %c0_65 = arith.constant 0 : index
      %59 = vector.load %arg4[%c0_62, %c0_63, %c0_64, %c0_65] : memref<1x1x16x4xbf16, #tpu.memory_space<vmem>>, vector<1x1x15x4xbf16>
      %60 = vector.shape_cast %59 : vector<1x1x15x4xbf16> to vector<1x15x4xbf16>
      %c9_66 = arith.constant 9 : index
      %c1_67 = arith.constant 1 : index
      %c0_68 = arith.constant 0 : index
      %61 = vector.load %arg9[%c9_66, %c1_67, %c0_68] : memref<10x16x12xbf16, #tpu.memory_space<vmem>>, vector<1x15x4xbf16>
      tpu.vector_store %arg9[%c9_66, %c1_67, %c0_68], %60 {strides = array<i32>} : memref<10x16x12xbf16, #tpu.memory_space<vmem>>, vector<1x15x4xbf16>,
      %c0_69 = arith.constant 0 : index
      %c0_70 = arith.constant 0 : index
      %c1_71 = arith.constant 1 : index
      %c0_72 = arith.constant 0 : index
      %62 = vector.load %arg4[%c0_69, %c0_70, %c1_71, %c0_72] : memref<1x1x16x4xbf16, #tpu.memory_space<vmem>>, vector<1x1x15x4xbf16>
      %63 = vector.shape_cast %62 : vector<1x1x15x4xbf16> to vector<1x15x4xbf16>
      %c9_73 = arith.constant 9 : index
      %c0_74 = arith.constant 0 : index
      %c8_75 = arith.constant 8 : index
      %64 = vector.load %arg9[%c9_73, %c0_74, %c8_75] : memref<10x16x12xbf16, #tpu.memory_space<vmem>>, vector<1x15x4xbf16>
      tpu.vector_store %arg9[%c9_73, %c0_74, %c8_75], %63 {strides = array<i32>} : memref<10x16x12xbf16, #tpu.memory_space<vmem>>, vector<1x15x4xbf16>,
    } else {
    }
    %c0_28 = arith.constant 0 : index
    %c0_29 = arith.constant 0 : index
    %c0_30 = arith.constant 0 : index
    %24 = vector.load %arg9[%c0_28, %c0_29, %c0_30] : memref<10x16x12xbf16, #tpu.memory_space<vmem>>, vector<8x16x12xbf16>
    %25 = vector.shape_cast %24 : vector<8x16x12xbf16> to vector<128x12xbf16>
    %c0_31 = arith.constant 0 : index
    %c0_32 = arith.constant 0 : index
    %26 = vector.load %arg5[%c0_31, %c0_32] : memref<36x4xbf16, #tpu.memory_space<vmem>>, vector<12x4xbf16>
    %cst_33 = arith.constant dense<0.000000e+00> : vector<128x4xf32>
    %27 = tpu.matmul %25, %26, %cst_33 {dimension_numbers = #tpu.dot_dimension_numbers<[1], [0], [0], [1], [0, 0, 1, 1], [], []>} : vector<128x12xbf16>, vector<12x4xbf16>, vector<128x4xf32> -> vector<128x4xf32>
    %c1_34 = arith.constant 1 : index
    %c0_35 = arith.constant 0 : index
    %c0_36 = arith.constant 0 : index
    %28 = vector.load %arg9[%c1_34, %c0_35, %c0_36] : memref<10x16x12xbf16, #tpu.memory_space<vmem>>, vector<8x16x12xbf16>
    %29 = vector.shape_cast %28 : vector<8x16x12xbf16> to vector<128x12xbf16>
    %c12 = arith.constant 12 : index
    %c0_37 = arith.constant 0 : index
    %30 = vector.load %arg5[%c12, %c0_37] : memref<36x4xbf16, #tpu.memory_space<vmem>>, vector<12x4xbf16>
    %cst_38 = arith.constant dense<0.000000e+00> : vector<128x4xf32>
    %31 = tpu.matmul %29, %30, %cst_38 {dimension_numbers = #tpu.dot_dimension_numbers<[1], [0], [0], [1], [0, 0, 1, 1], [], []>} : vector<128x12xbf16>, vector<12x4xbf16>, vector<128x4xf32> -> vector<128x4xf32>
    %32 = arith.addf %27, %31 : vector<128x4xf32>
    %c2 = arith.constant 2 : index
    %c0_39 = arith.constant 0 : index
    %c0_40 = arith.constant 0 : index
    %33 = vector.load %arg9[%c2, %c0_39, %c0_40] : memref<10x16x12xbf16, #tpu.memory_space<vmem>>, vector<8x16x12xbf16>
    %34 = vector.shape_cast %33 : vector<8x16x12xbf16> to vector<128x12xbf16>
    %c24 = arith.constant 24 : index
    %c0_41 = arith.constant 0 : index
    %35 = vector.load %arg5[%c24, %c0_41] : memref<36x4xbf16, #tpu.memory_space<vmem>>, vector<12x4xbf16>
    %cst_42 = arith.constant dense<0.000000e+00> : vector<128x4xf32>
    %36 = tpu.matmul %34, %35, %cst_42 {dimension_numbers = #tpu.dot_dimension_numbers<[1], [0], [0], [1], [0, 0, 1, 1], [], []>} : vector<128x12xbf16>, vector<12x4xbf16>, vector<128x4xf32> -> vector<128x4xf32>
    %37 = arith.addf %32, %36 : vector<128x4xf32>
    %c0_43 = arith.constant 0 : index
    %c0_44 = arith.constant 0 : index
    %38 = vector.load %arg6[%c0_43, %c0_44] : memref<1x4xf32, #tpu.memory_space<vmem>>, vector<1x4xf32>
    %39 = vector.broadcast %38 : vector<1x4xf32> to vector<128x4xf32>
    %40 = arith.mulf %37, %39 : vector<128x4xf32>
    %c0_45 = arith.constant 0 : index
    %c0_46 = arith.constant 0 : index
    %41 = vector.load %arg7[%c0_45, %c0_46] : memref<1x4xf32, #tpu.memory_space<vmem>>, vector<1x4xf32>
    %42 = vector.broadcast %41 : vector<1x4xf32> to vector<128x4xf32>
    %43 = arith.addf %40, %42 : vector<128x4xf32>
    %cst_47 = arith.constant 0.000000e+00 : f32
    %44 = vector.broadcast %cst_47 : f32 to vector<128x4xf32>
    %45 = arith.maximumf %43, %44 : vector<128x4xf32>
    %c0_48 = arith.constant 0 : index
    %c0_49 = arith.constant 0 : index
    %c0_50 = arith.constant 0 : index
    %c0_51 = arith.constant 0 : index
    %46 = vector.load %arg2[%c0_48, %c0_49, %c0_50, %c0_51] : memref<1x8x16x4xbf16, #tpu.memory_space<vmem>>, vector<1x8x16x4xbf16>
    %47 = vector.shape_cast %46 : vector<1x8x16x4xbf16> to vector<8x16x4xbf16>
    %48 = arith.extf %47 : vector<8x16x4xbf16> to vector<8x16x4xf32>
    %49 = vector.shape_cast %48 : vector<8x16x4xf32> to vector<128x4xf32>
    %50 = arith.addf %49, %45 : vector<128x4xf32>
    %51 = arith.truncf %50 : vector<128x4xf32> to vector<128x4xbf16>
    %52 = vector.shape_cast %51 : vector<128x4xbf16> to vector<8x16x4xbf16>
    %c0_52 = arith.constant 0 : index
    %c0_53 = arith.constant 0 : index
    %c0_54 = arith.constant 0 : index
    %c0_55 = arith.constant 0 : index
    %53 = vector.load %arg8[%c0_52, %c0_53, %c0_54, %c0_55] : memref<1x8x16x4xbf16, #tpu.memory_space<vmem>>, vector<1x8x16x4xbf16>
    %54 = vector.shape_cast %53 : vector<1x8x16x4xbf16> to vector<8x16x4xbf16>
    %55 = vector.shape_cast %52 : vector<8x16x4xbf16> to vector<1x8x16x4xbf16>
    tpu.vector_store %arg8[%c0_52, %c0_53, %c0_54, %c0_55], %55 {strides = array<i32>} : memref<1x8x16x4xbf16, #tpu.memory_space<vmem>>, vector<1x8x16x4xbf16>,
    return
  }
  func.func @transform_0(%arg0: i32, %arg1: i32) -> (i32, i32, i32, i32) {
    %c0_i32 = arith.constant 0 : i32
    %c0_i32_0 = arith.constant 0 : i32
    %c0_i32_1 = arith.constant 0 : i32
    return %arg0, %arg1, %c0_i32, %c0_i32_0 : i32, i32, i32, i32
  }
  func.func @transform_1(%arg0: i32, %arg1: i32) -> (i32, i32, i32, i32) {
    %c8_i32 = arith.constant 8 : i32
    %0 = arith.muli %arg1, %c8_i32 : i32
    %c1_i32 = arith.constant 1 : i32
    %1 = arith.subi %0, %c1_i32 : i32
    %c0_i32 = arith.constant 0 : i32
    %2 = arith.maxsi %1, %c0_i32 : i32
    %c0_i32_0 = arith.constant 0 : i32
    %c0_i32_1 = arith.constant 0 : i32
    %c0_i32_2 = arith.constant 0 : i32
    return %arg0, %2, %c0_i32_0, %c0_i32_1 : i32, i32, i32, i32
  }
  func.func @transform_2(%arg0: i32, %arg1: i32) -> (i32, i32, i32, i32) {
    %c8_i32 = arith.constant 8 : i32
    %0 = arith.muli %arg1, %c8_i32 : i32
    %c8_i32_0 = arith.constant 8 : i32
    %1 = arith.addi %0, %c8_i32_0 : i32
    %c15_i32 = arith.constant 15 : i32
    %2 = arith.minsi %1, %c15_i32 : i32
    %c0_i32 = arith.constant 0 : i32
    %c0_i32_1 = arith.constant 0 : i32
    %c0_i32_2 = arith.constant 0 : i32
    return %arg0, %2, %c0_i32, %c0_i32_1 : i32, i32, i32, i32
  }
  func.func @transform_3(%arg0: i32, %arg1: i32) -> (i32, i32) {
    %c0_i32 = arith.constant 0 : i32
    %c0_i32_0 = arith.constant 0 : i32
    %c0_i32_1 = arith.constant 0 : i32
    return %c0_i32, %c0_i32_0 : i32, i32
  }
  func.func @transform_4(%arg0: i32, %arg1: i32) -> (i32, i32) {
    %c0_i32 = arith.constant 0 : i32
    %c0_i32_0 = arith.constant 0 : i32
    %c0_i32_1 = arith.constant 0 : i32
    return %c0_i32, %c0_i32_0 : i32, i32
  }
  func.func @transform_5(%arg0: i32, %arg1: i32) -> (i32, i32) {
    %c0_i32 = arith.constant 0 : i32
    %c0_i32_0 = arith.constant 0 : i32
    %c0_i32_1 = arith.constant 0 : i32
    return %c0_i32, %c0_i32_0 : i32, i32
  }
  func.func @transform_6(%arg0: i32, %arg1: i32) -> (i32, i32, i32, i32) {
    %c0_i32 = arith.constant 0 : i32
    %c0_i32_0 = arith.constant 0 : i32
    %c0_i32_1 = arith.constant 0 : i32
    return %arg0, %arg1, %c0_i32, %c0_i32_0 : i32, i32, i32, i32
  }
}

</mosaic_0001>

<llo_original>
// kernel: tpu_custom_call.1
$region0: #{tpu_custom_call.1}
  #allocation0 [shape = 'u32[]', space=smem, size = 0x4, offset = 0x4, fixed_abs, tag = 'smem constant byte address 0x4 - core index']
  #allocation1 [shape = 'u32[72,128]{1,0:T(1,128)}', space=vmem, size = 0x9000, scoped, tag = 'internal scratch']
  #allocation2 [shape = 'bf16[10,16,12]{2,1,0:T(8,128)(2,1)}', space=vmem, size = 0xa000, scoped, tag = 'scratch operand']
  %s0 = inlined_call_operand.vmem [shape: bf16[2,16,16,4], index: 0, kind: input, shape index: {}]
  %s1 = inlined_call_operand.vmem [shape: bf16[2,16,16,4], index: 1, kind: input, shape index: {}]
  %s2 = inlined_call_operand.vmem [shape: bf16[2,16,16,4], index: 2, kind: input, shape index: {}]
  %s3 = inlined_call_operand.vmem [shape: bf16[36,4], index: 3, kind: input, shape index: {}]
  %s4 = inlined_call_operand.vmem [shape: f32[1,4], index: 4, kind: input, shape index: {}]
  %s5 = inlined_call_operand.vmem [shape: f32[1,4], index: 5, kind: input, shape index: {}]
  %s6 = inlined_call_operand.vmem [shape: bf16[2,16,16,4], index: 6, kind: output, shape index: {}]
  %s7 = sld [smem:[#allocation0]]
  $region73: #{tpu_custom_call.1} parent=0
    _
  %s9 = ssub.s32 1, %s7
  %s10 = scalar_select 0, %s9, %s7
  loop: start=0, step=1, limit=6
  $region2: #{tpu_custom_call.1} parent=0 // loop_pre_header
    _
  $region3: #{tpu_custom_call.1} parent=0 // loop_header
    %s12 = sphi 0, %s16
    %p13 = scmp.ge.s32.totalorder %s12, 6
    %s19 = sphi 0, %s31
    %s20 = sphi 0, %s27
    %s21 = sphi 0, %s19
    %s22 = sphi 0, %s20
    %s23 = sphi 0, %s21
    %s24 = sphi 0, %s22
    %s36 = sphi 0, %s38
    %s39 = sphi 0, %s36
    %s40 = sphi 0, %s39
    %s56 = sphi 0, %s40
    %s72 = sphi 0, %s74
    %s75 = sphi 0, %s72
    %s76 = sphi 0, %s75
    %s92 = sphi 0, %s76
    %s108 = sphi 0, %s110
    %s111 = sphi 0, %s108
    %s112 = sphi 0, %s111
    %s128 = sphi 0, %s112
    %s132 = sphi 0, %s132
    %s134 = sphi 0, %s132
    %s135 = sphi 0, %s134
    %s149 = sphi 0, %s135
    %s153 = sphi 0, %s153
    %s155 = sphi 0, %s153
    %s156 = sphi 0, %s155
    %s170 = sphi 0, %s156
    %s174 = sphi 0, %s174
    %s176 = sphi 0, %s174
    %s177 = sphi 0, %s176
    %s191 = sphi 0, %s177
    %s199 = sphi 0, %s201
    %s202 = sphi 0, %s199
    %s203 = sphi 0, %s202
    %s219 = sphi 0, %s203
  $region4: #{tpu_custom_call.1} parent=0 // loop_header_branch
    %15 = sbr.rel (%p13) target = $region8
  $region5: #{tpu_custom_call.1} parent=0 // loop_body
    %s17 = ssub.s32 %s12, 1
    %s18 = ssub.s32 %s12, 2
    %s25 = sadd.s32 1, %s20
    %p26 = scmp.ge.s32.totalorder %s25, 2
    %s27 = scalar_select %p26, 0, %s25
    %s28 = sadd.s32 1, %s19
    %s29 = scalar_select %p26, %s28, %s19
    %p30 = scmp.ge.s32.totalorder %s29, 2
    %s31 = scalar_select %p30, 0, %s29
    %s32 = ssub.s32 %s19, %s31
    %s33 = ssub.s32 %s20, %s27
    %s34 = sor.u32 %s32, %s33
    %p35 = scmp.eq.s32.totalorder %s34, 0
    %s37 = sadd.s32 %s36, 1
    %s38 = scalar_select %p35, %s36, %s37
    %p41 = pneg %p35
    %p42 = scmp.eq.s32.totalorder %s12, 3
    %p43 = por %p41, %p42
    %p44 = scmp.ne.s32.totalorder %s36, %s39
    %p45 = scmp.eq.s32.totalorder %s12, 0
    %p46 = por %p44, %p45
    %p47 = scmp.ne.s32.totalorder %s36, %s39
    %p48 = scmp.eq.s32.totalorder %s17, 3
    %p49 = por %p47, %p48
    %p50 = scmp.ne.s32.totalorder %s39, %s40
    %p51 = scmp.eq.s32.totalorder %s17, 0
    %p52 = por %p50, %p51
    %p53 = scmp.ne.s32.totalorder %s39, %s40
    %p54 = scmp.eq.s32.totalorder %s18, 3
    %p55 = por %p53, %p54
    %p57 = scmp.ne.s32.totalorder %s40, %s56
    %p58 = scmp.eq.s32.totalorder %s18, 0
    %p59 = por %p57, %p58
    %s60 = smul.u32 %s20, 8
    %s61 = ssub.s32 %s60, 1
    %p62 = scmp.gt.s32.totalorder %s61, 0
    %s63 = scalar_select %p62, %s61, 0
    %s64 = smul.u32 %s27, 8
    %s65 = ssub.s32 %s64, 1
    %p66 = scmp.gt.s32.totalorder %s65, 0
    %s67 = scalar_select %p66, %s65, 0
    %s68 = ssub.s32 %s19, %s31
    %s69 = ssub.s32 %s63, %s67
    %s70 = sor.u32 %s68, %s69
    %p71 = scmp.eq.s32.totalorder %s70, 0
    %s73 = sadd.s32 %s72, 1
    %s74 = scalar_select %p71, %s72, %s73
    %p77 = pneg %p71
    %p78 = scmp.eq.s32.totalorder %s12, 3
    %p79 = por %p77, %p78
    %p80 = scmp.ne.s32.totalorder %s72, %s75
    %p81 = scmp.eq.s32.totalorder %s12, 0
    %p82 = por %p80, %p81
    %p83 = scmp.ne.s32.totalorder %s72, %s75
    %p84 = scmp.eq.s32.totalorder %s17, 3
    %p85 = por %p83, %p84
    %p86 = scmp.ne.s32.totalorder %s75, %s76
    %p87 = scmp.eq.s32.totalorder %s17, 0
    %p88 = por %p86, %p87
    %p89 = scmp.ne.s32.totalorder %s75, %s76
    %p90 = scmp.eq.s32.totalorder %s18, 3
    %p91 = por %p89, %p90
    %p93 = scmp.ne.s32.totalorder %s76, %s92
    %p94 = scmp.eq.s32.totalorder %s18, 0
    %p95 = por %p93, %p94
    %s96 = smul.u32 %s20, 8
    %s97 = sadd.s32 %s96, 8
    %p98 = scmp.lt.s32.totalorder %s97, 15
    %s99 = scalar_select %p98, %s97, 15
    %s100 = smul.u32 %s27, 8
    %s101 = sadd.s32 %s100, 8
    %p102 = scmp.lt.s32.totalorder %s101, 15
    %s103 = scalar_select %p102, %s101, 15
    %s104 = ssub.s32 %s19, %s31
    %s105 = ssub.s32 %s99, %s103
    %s106 = sor.u32 %s104, %s105
    %p107 = scmp.eq.s32.totalorder %s106, 0
    %s109 = sadd.s32 %s108, 1
    %s110 = scalar_select %p107, %s108, %s109
    %p113 = pneg %p107
    %p114 = scmp.eq.s32.totalorder %s12, 3
    %p115 = por %p113, %p114
    %p116 = scmp.ne.s32.totalorder %s108, %s111
    %p117 = scmp.eq.s32.totalorder %s12, 0
    %p118 = por %p116, %p117
    %p119 = scmp.ne.s32.totalorder %s108, %s111
    %p120 = scmp.eq.s32.totalorder %s17, 3
    %p121 = por %p119, %p120
    %p122 = scmp.ne.s32.totalorder %s111, %s112
    %p123 = scmp.eq.s32.totalorder %s17, 0
    %p124 = por %p122, %p123
    %p125 = scmp.ne.s32.totalorder %s111, %s112
    %p126 = scmp.eq.s32.totalorder %s18, 3
    %p127 = por %p125, %p126
    %p129 = scmp.ne.s32.totalorder %s112, %s128
    %p130 = scmp.eq.s32.totalorder %s18, 0
    %p131 = por %p129, %p130
    %s133 = sadd.s32 %s132, 1
    %p136 = scmp.eq.s32.totalorder %s12, 3
    %p137 = scmp.ne.s32.totalorder %s132, %s134
    %p138 = scmp.eq.s32.totalorder %s12, 0
    %p139 = por %p137, %p138
    %p140 = scmp.ne.s32.totalorder %s132, %s134
    %p141 = scmp.eq.s32.totalorder %s17, 3
    %p142 = por %p140, %p141
    %p143 = scmp.ne.s32.totalorder %s134, %s135
    %p144 = scmp.eq.s32.totalorder %s17, 0
    %p145 = por %p143, %p144
    %p146 = scmp.ne.s32.totalorder %s134, %s135
    %p147 = scmp.eq.s32.totalorder %s18, 3
    %p148 = por %p146, %p147
    %p150 = scmp.ne.s32.totalorder %s135, %s149
    %p151 = scmp.eq.s32.totalorder %s18, 0
    %p152 = por %p150, %p151
    %s154 = sadd.s32 %s153, 1
    %p157 = scmp.eq.s32.totalorder %s12, 3
    %p158 = scmp.ne.s32.totalorder %s153, %s155
    %p159 = scmp.eq.s32.totalorder %s12, 0
    %p160 = por %p158, %p159
    %p161 = scmp.ne.s32.totalorder %s153, %s155
    %p162 = scmp.eq.s32.totalorder %s17, 3
    %p163 = por %p161, %p162
    %p164 = scmp.ne.s32.totalorder %s155, %s156
    %p165 = scmp.eq.s32.totalorder %s17, 0
    %p166 = por %p164, %p165
    %p167 = scmp.ne.s32.totalorder %s155, %s156
    %p168 = scmp.eq.s32.totalorder %s18, 3
    %p169 = por %p167, %p168
    %p171 = scmp.ne.s32.totalorder %s156, %s170
    %p172 = scmp.eq.s32.totalorder %s18, 0
    %p173 = por %p171, %p172
    %s175 = sadd.s32 %s174, 1
    %p178 = scmp.eq.s32.totalorder %s12, 3
    %p179 = scmp.ne.s32.totalorder %s174, %s176
    %p180 = scmp.eq.s32.totalorder %s12, 0
    %p181 = por %p179, %p180
    %p182 = scmp.ne.s32.totalorder %s174, %s176
    %p183 = scmp.eq.s32.totalorder %s17, 3
    %p184 = por %p182, %p183
    %p185 = scmp.ne.s32.totalorder %s176, %s177
    %p186 = scmp.eq.s32.totalorder %s17, 0
    %p187 = por %p185, %p186
    %p188 = scmp.ne.s32.totalorder %s176, %s177
    %p189 = scmp.eq.s32.totalorder %s18, 3
    %p190 = por %p188, %p189
    %p192 = scmp.ne.s32.totalorder %s177, %s191
    %p193 = scmp.eq.s32.totalorder %s18, 0
    %p194 = por %p192, %p193
    %s195 = ssub.s32 %s19, %s31
    %s196 = ssub.s32 %s20, %s27
    %s197 = sor.u32 %s195, %s196
    %p198 = scmp.eq.s32.totalorder %s197, 0
    %s200 = sadd.s32 %s199, 1
    %s201 = scalar_select %p198, %s199, %s200
    %p204 = pneg %p198
    %p205 = scmp.eq.s32.totalorder %s12, 3
    %p206 = por %p204, %p205
    %p207 = scmp.ne.s32.totalorder %s199, %s202
    %p208 = scmp.eq.s32.totalorder %s12, 0
    %p209 = por %p207, %p208
    %p210 = scmp.ne.s32.totalorder %s199, %s202
    %p211 = scmp.eq.s32.totalorder %s17, 3
    %p212 = por %p210, %p211
    %p213 = scmp.ne.s32.totalorder %s202, %s203
    %p214 = scmp.eq.s32.totalorder %s17, 0
    %p215 = por %p213, %p214
    %p216 = scmp.ne.s32.totalorder %s202, %s203
    %p217 = scmp.eq.s32.totalorder %s18, 3
    %p218 = por %p216, %p217
    %p220 = scmp.ne.s32.totalorder %s203, %s219
    %p221 = scmp.eq.s32.totalorder %s18, 0
    %p222 = por %p220, %p221
    %p223 = scmp.le.s32.totalorder 1, %s12
    %p224 = scmp.lt.s32.totalorder %s12, 5
    %p225 = pnand %p223, %p224
    %p226 = pneg %p225
    // Predicated region
    $region9: #{tpu_custom_call.1} parent=5 // pred_check
      _
    $region10: #{tpu_custom_call.1} parent=5 // pred_check_branch
      %228 = sbr.rel (%p225) target = $region12
    $region11: #{tpu_custom_call.1} parent=5 // pred_region
      %s229 = ssub.s32 %s12, 1
      // Predicated region
      $region13: #{tpu_custom_call.1} parent=11 // pred_check
        %p230 = pneg %p145
      $region14: #{tpu_custom_call.1} parent=11 // pred_check_branch
        %232 = sbr.rel (%p230) target = $region16
      $region15: #{tpu_custom_call.1} parent=11 // pred_region
        _
      $region16: #{tpu_custom_call.1} parent=11 // pred_fallthru
        _
      // Predicated region
      $region17: #{tpu_custom_call.1} parent=11 // pred_check
        %p233 = pneg %p166
      $region18: #{tpu_custom_call.1} parent=11 // pred_check_branch
        %235 = sbr.rel (%p233) target = $region20
      $region19: #{tpu_custom_call.1} parent=11 // pred_region
        _
      $region20: #{tpu_custom_call.1} parent=11 // pred_fallthru
        _
      // Predicated region
      $region21: #{tpu_custom_call.1} parent=11 // pred_check
        %p236 = pneg %p187
      $region22: #{tpu_custom_call.1} parent=11 // pred_check_branch
        %238 = sbr.rel (%p236) target = $region24
      $region23: #{tpu_custom_call.1} parent=11 // pred_region
        _
      $region24: #{tpu_custom_call.1} parent=11 // pred_fallthru
        _
    $region12: #{tpu_custom_call.1} parent=5 // pred_fallthru
      _
    %p239 = scmp.lt.s32.totalorder %s12, 4
    // Predicated region
    $region25: #{tpu_custom_call.1} parent=5 // pred_check
      %p240 = pneg %p239
    $region26: #{tpu_custom_call.1} parent=5 // pred_check_branch
      %242 = sbr.rel (%p240) target = $region28
    $region27: #{tpu_custom_call.1} parent=5 // pred_region
      // Predicated region
      $region29: #{tpu_custom_call.1} parent=27 // pred_check
        %p243 = pneg %p46
      $region30: #{tpu_custom_call.1} parent=27 // pred_check_branch
        %245 = sbr.rel (%p243) target = $region32
      $region31: #{tpu_custom_call.1} parent=27 // pred_region
        %s246 = smul.u32 8, %s20
        %p247 = scmp.lt.s32.totalorder %s19, 1
        %s248 = scalar_select %p247, %s19, 1
        %p249 = scmp.lt.s32.totalorder %s246, 15
        %s250 = scalar_select %p249, %s246, 15
        %s251 = smul.addr %s250, 2
        %s252 = smul.addr %s248, 32
        %s253 = sadd.s32 %s251, %s252
        %s254 = smul.addr %s253, 4
        %s255 = scalar_lea.vmem %s0, %s254
        %s256 = smul.u32 8, %s20
      $region32: #{tpu_custom_call.1} parent=27 // pred_fallthru
        _
      // Predicated region
      $region33: #{tpu_custom_call.1} parent=27 // pred_check
        %p257 = pneg %p82
      $region34: #{tpu_custom_call.1} parent=27 // pred_check_branch
        %259 = sbr.rel (%p257) target = $region36
      $region35: #{tpu_custom_call.1} parent=27 // pred_region
        %s260 = smul.u32 %s20, 8
        %s261 = ssub.s32 %s260, 1
        %p262 = scmp.gt.s32.totalorder %s261, 0
        %s263 = scalar_select %p262, %s261, 0
        %p264 = scmp.lt.s32.totalorder %s19, 1
        %s265 = scalar_select %p264, %s19, 1
        %p266 = scmp.lt.s32.totalorder %s263, 15
        %s267 = scalar_select %p266, %s263, 15
        %s268 = smul.addr %s267, 2
        %s269 = smul.addr %s265, 32
        %s270 = sadd.s32 %s268, %s269
        %s271 = smul.addr %s270, 4
        %s272 = scalar_lea.vmem %s1, %s271
        %s273 = smul.u32 %s20, 8
        %s274 = ssub.s32 %s273, 1
        %p275 = scmp.gt.s32.totalorder %s274, 0
        %s276 = scalar_select %p275, %s274, 0
      $region36: #{tpu_custom_call.1} parent=27 // pred_fallthru
        _
      // Predicated region
      $region37: #{tpu_custom_call.1} parent=27 // pred_check
        %p277 = pneg %p118
      $region38: #{tpu_custom_call.1} parent=27 // pred_check_branch
        %279 = sbr.rel (%p277) target = $region40
      $region39: #{tpu_custom_call.1} parent=27 // pred_region
        %s280 = smul.u32 %s20, 8
        %s281 = sadd.s32 %s280, 8
        %p282 = scmp.lt.s32.totalorder %s281, 15
        %s283 = scalar_select %p282, %s281, 15
        %p284 = scmp.lt.s32.totalorder %s19, 1
        %s285 = scalar_select %p284, %s19, 1
        %p286 = scmp.lt.s32.totalorder %s283, 15
        %s287 = scalar_select %p286, %s283, 15
        %s288 = smul.addr %s287, 2
        %s289 = smul.addr %s285, 32
        %s290 = sadd.s32 %s288, %s289
        %s291 = smul.addr %s290, 4
        %s292 = scalar_lea.vmem %s2, %s291
        %s293 = smul.u32 %s20, 8
        %s294 = sadd.s32 %s293, 8
        %p295 = scmp.lt.s32.totalorder %s294, 15
        %s296 = scalar_select %p295, %s294, 15
      $region40: #{tpu_custom_call.1} parent=27 // pred_fallthru
        _
    $region28: #{tpu_custom_call.1} parent=5 // pred_fallthru
      _
    %p297 = scmp.le.s32.totalorder 1, %s12
    %p298 = scmp.lt.s32.totalorder %s12, 5
    %p299 = pnand %p297, %p298
    %p300 = pneg %p299
    // Predicated region
    $region41: #{tpu_custom_call.1} parent=5 // pred_check
      _
    $region42: #{tpu_custom_call.1} parent=5 // pred_check_branch
      %302 = sbr.rel (%p299) target = $region44
    $region43: #{tpu_custom_call.1} parent=5 // pred_region
      %s303 = ssub.s32 %s12, 1
      %s304 = smul.u32 8, %s22
      %p305 = scmp.lt.s32.totalorder %s21, 1
      %s306 = scalar_select %p305, %s21, 1
      %p307 = scmp.lt.s32.totalorder %s304, 15
      %s308 = scalar_select %p307, %s304, 15
      %s309 = smul.addr %s308, 2
      %s310 = smul.addr %s306, 32
      %s311 = sadd.s32 %s309, %s310
      %s312 = smul.addr %s311, 4
      %s313 = scalar_lea.vmem %s0, %s312
      %p314 = pneg %p52
      %p315 = pneg %p49
      %s316 = smul.u32 %s22, 8
      %s317 = ssub.s32 %s316, 1
      %p318 = scmp.gt.s32.totalorder %s317, 0
      %s319 = scalar_select %p318, %s317, 0
      %p320 = scmp.lt.s32.totalorder %s21, 1
      %s321 = scalar_select %p320, %s21, 1
      %p322 = scmp.lt.s32.totalorder %s319, 15
      %s323 = scalar_select %p322, %s319, 15
      %s324 = smul.addr %s323, 2
      %s325 = smul.addr %s321, 32
      %s326 = sadd.s32 %s324, %s325
      %s327 = smul.addr %s326, 4
      %s328 = scalar_lea.vmem %s1, %s327
      %p329 = pneg %p88
      %p330 = pneg %p85
      %s331 = smul.u32 %s22, 8
      %s332 = sadd.s32 %s331, 8
      %p333 = scmp.lt.s32.totalorder %s332, 15
      %s334 = scalar_select %p333, %s332, 15
      %p335 = scmp.lt.s32.totalorder %s21, 1
      %s336 = scalar_select %p335, %s21, 1
      %p337 = scmp.lt.s32.totalorder %s334, 15
      %s338 = scalar_select %p337, %s334, 15
      %s339 = smul.addr %s338, 2
      %s340 = smul.addr %s336, 32
      %s341 = sadd.s32 %s339, %s340
      %s342 = smul.addr %s341, 4
      %s343 = scalar_lea.vmem %s2, %s342
      %p344 = pneg %p124
      %p345 = pneg %p121
      %p346 = pneg %p145
      %p347 = pneg %p142
      %p348 = pneg %p166
      %p349 = pneg %p163
      %p350 = pneg %p187
      %p351 = pneg %p184
      %p352 = pneg %p215
      %p353 = pneg %p212
      %s354 = smul.u32 8, %s22
      %p355 = scmp.lt.s32.totalorder %s21, 1
      %s356 = scalar_select %p355, %s21, 1
      %p357 = scmp.lt.s32.totalorder %s354, 15
      %s358 = scalar_select %p357, %s354, 15
      %s359 = smul.addr %s358, 2
      %s360 = smul.addr %s356, 32
      %s361 = sadd.s32 %s359, %s360
      %s362 = smul.addr %s361, 4
      %s363 = scalar_lea.vmem %s6, %s362
      %s364 = smul.u32 8, %s22
      %p365 = scmp.lt.s32.totalorder %s21, 1
      %s366 = scalar_select %p365, %s21, 1
      %p367 = scmp.lt.s32.totalorder %s364, 15
      %s368 = scalar_select %p367, %s364, 15
      %s369 = smul.addr %s368, 2
      %s370 = smul.addr %s366, 32
      %s371 = sadd.s32 %s369, %s370
      %s372 = smul.addr %s371, 4
      %s373 = scalar_lea.vmem %s0, %s372
      %s374 = smul.u32 8, %s22
      %s375 = smul.u32 %s22, 8
      %s376 = ssub.s32 %s375, 1
      %p377 = scmp.gt.s32.totalorder %s376, 0
      %s378 = scalar_select %p377, %s376, 0
      %p379 = scmp.lt.s32.totalorder %s21, 1
      %s380 = scalar_select %p379, %s21, 1
      %p381 = scmp.lt.s32.totalorder %s378, 15
      %s382 = scalar_select %p381, %s378, 15
      %s383 = smul.addr %s382, 2
      %s384 = smul.addr %s380, 32
      %s385 = sadd.s32 %s383, %s384
      %s386 = smul.addr %s385, 4
      %s387 = scalar_lea.vmem %s1, %s386
      %s388 = smul.u32 %s22, 8
      %s389 = ssub.s32 %s388, 1
      %p390 = scmp.gt.s32.totalorder %s389, 0
      %s391 = scalar_select %p390, %s389, 0
      %s392 = smul.u32 %s22, 8
      %s393 = sadd.s32 %s392, 8
      %p394 = scmp.lt.s32.totalorder %s393, 15
      %s395 = scalar_select %p394, %s393, 15
      %p396 = scmp.lt.s32.totalorder %s21, 1
      %s397 = scalar_select %p396, %s21, 1
      %p398 = scmp.lt.s32.totalorder %s395, 15
      %s399 = scalar_select %p398, %s395, 15
      %s400 = smul.addr %s399, 2
      %s401 = smul.addr %s397, 32
      %s402 = sadd.s32 %s400, %s401
      %s403 = smul.addr %s402, 4
      %s404 = scalar_lea.vmem %s2, %s403
      %s405 = smul.u32 %s22, 8
      %s406 = sadd.s32 %s405, 8
      %p407 = scmp.lt.s32.totalorder %s406, 15
      %s408 = scalar_select %p407, %s406, 15
      %s409 = smul.u32 8, %s22
      %p410 = scmp.lt.s32.totalorder %s21, 1
      %s411 = scalar_select %p410, %s21, 1
      %p412 = scmp.lt.s32.totalorder %s409, 15
      %s413 = scalar_select %p412, %s409, 15
      %s414 = smul.addr %s413, 2
      %s415 = smul.addr %s411, 32
      %s416 = sadd.s32 %s414, %s415
      %s417 = smul.addr %s416, 4
      %s418 = scalar_lea.vmem %s6, %s417
      %s419 = smul.u32 8, %s22
      %vm421 = vcmask 24576
      %vm422 = vsmask.f32 256
      %vm423 = vmand %vm421, %vm422
      %v424 = vld [vmem:[#allocation2] sm:$0x1]
      %v425 = vsel %vm423, 0, %v424
      %426 = vst [vmem:[#allocation2] sm:$0x1] %v425
      %v427 = vld [vmem:[#allocation2 + $0x8] sm:$0x1]
      %v428 = vsel %vm423, 0, %v427
      %429 = vst [vmem:[#allocation2 + $0x8] sm:$0x1] %v428
      %v430 = vld [vmem:[#allocation2 + $0x10] sm:$0x1]
      %v431 = vsel %vm423, 0, %v430
      %432 = vst [vmem:[#allocation2 + $0x10] sm:$0x1] %v431
      %v433 = vld [vmem:[#allocation2 + $0x18] sm:$0x1]
      %v434 = vsel %vm423, 0, %v433
      %435 = vst [vmem:[#allocation2 + $0x18] sm:$0x1] %v434
      %v436 = vld [vmem:[#allocation2 + $0x20] sm:$0x1]
      %v437 = vsel %vm423, 0, %v436
      %438 = vst [vmem:[#allocation2 + $0x20] sm:$0x1] %v437
      %v439 = vld [vmem:[#allocation2 + $0x28] sm:$0x1]
      %v440 = vsel %vm423, 0, %v439
      %441 = vst [vmem:[#allocation2 + $0x28] sm:$0x1] %v440
      %v442 = vld [vmem:[#allocation2 + $0x30] sm:$0x1]
      %v443 = vsel %vm423, 0, %v442
      %444 = vst [vmem:[#allocation2 + $0x30] sm:$0x1] %v443
      %v445 = vld [vmem:[#allocation2 + $0x38] sm:$0x1]
      %v446 = vsel %vm423, 0, %v445
      %447 = vst [vmem:[#allocation2 + $0x38] sm:$0x1] %v446
      %v448 = vld [vmem:[#allocation2 + $0x40] sm:$0x1]
      %v449 = vsel %vm423, 0, %v448
      %450 = vst [vmem:[#allocation2 + $0x40] sm:$0x1] %v449
      %v451 = vld [vmem:[#allocation2 + $0x48] sm:$0x1]
      %v452 = vsel %vm423, 0, %v451
      %453 = vst [vmem:[#allocation2 + $0x48] sm:$0x1] %v452
      %vm454 = vcmask 93251
      %vm455 = vsmask.f32 7950
      %vm456 = vmand %vm454, %vm455
      %v457 = vld [vmem:[#allocation2 + $0x4] sm:$0x8]
      %v458 = vsel %vm456, 0, %v457
      %459 = vst [vmem:[#allocation2 + $0x4] sm:$0x8] %v458
      %v460 = vld [vmem:[#allocation2 + $0xc] sm:$0x8]
      %v461 = vsel %vm456, 0, %v460
      %462 = vst [vmem:[#allocation2 + $0xc] sm:$0x8] %v461
      %v463 = vld [vmem:[#allocation2 + $0x14] sm:$0x8]
      %v464 = vsel %vm456, 0, %v463
      %465 = vst [vmem:[#allocation2 + $0x14] sm:$0x8] %v464
      %v466 = vld [vmem:[#allocation2 + $0x1c] sm:$0x8]
      %v467 = vsel %vm456, 0, %v466
      %468 = vst [vmem:[#allocation2 + $0x1c] sm:$0x8] %v467
      %v469 = vld [vmem:[#allocation2 + $0x24] sm:$0x8]
      %v470 = vsel %vm456, 0, %v469
      %471 = vst [vmem:[#allocation2 + $0x24] sm:$0x8] %v470
      %v472 = vld [vmem:[#allocation2 + $0x2c] sm:$0x8]
      %v473 = vsel %vm456, 0, %v472
      %474 = vst [vmem:[#allocation2 + $0x2c] sm:$0x8] %v473
      %v475 = vld [vmem:[#allocation2 + $0x34] sm:$0x8]
      %v476 = vsel %vm456, 0, %v475
      %477 = vst [vmem:[#allocation2 + $0x34] sm:$0x8] %v476
      %v478 = vld [vmem:[#allocation2 + $0x3c] sm:$0x8]
      %v479 = vsel %vm456, 0, %v478
      %480 = vst [vmem:[#allocation2 + $0x3c] sm:$0x8] %v479
      %v481 = vld [vmem:[#allocation2 + $0x44] sm:$0x8]
      %v482 = vsel %vm456, 0, %v481
      %483 = vst [vmem:[#allocation2 + $0x44] sm:$0x8] %v482
      %v484 = vld [vmem:[#allocation2 + $0x4c] sm:$0x8]
      %v485 = vsel %vm456, 0, %v484
      %486 = vst [vmem:[#allocation2 + $0x4c] sm:$0x8] %v485
      %v487 = vld [vmem:[%s373] sm:$0xf]
      %v488 = vld [vmem:[%s373 + $0x4] sm:$0xf]
      %v489 = vld [vmem:[%s373 + $0x8] sm:$0xf]
      %v490 = vld [vmem:[%s373 + $0xc] sm:$0xf]
      %v491 = vld [vmem:[%s373 + $0x10] sm:$0xf]
      %v492 = vld [vmem:[%s373 + $0x14] sm:$0xf]
      %v493 = vld [vmem:[%s373 + $0x18] sm:$0xf]
      %v494 = vld [vmem:[%s373 + $0x1c] sm:$0xf]
      %v495 = vld [vmem:[%s373 + $0x20] sm:$0xf]
      %v496 = vld [vmem:[%s373 + $0x24] sm:$0xf]
      %v497 = vld [vmem:[%s373 + $0x28] sm:$0xf]
      %v498 = vld [vmem:[%s373 + $0x2c] sm:$0xf]
      %v499 = vld [vmem:[%s373 + $0x30] sm:$0xf]
      %v500 = vld [vmem:[%s373 + $0x34] sm:$0xf]
      %v501 = vld [vmem:[%s373 + $0x38] sm:$0xf]
      %v502 = vld [vmem:[%s373 + $0x3c] sm:$0xf]
      %519 = vrot.lane.b32.xlu0 %v487, 4
      %v520 = vpop.permute.xlu0 %519
      %521 = vrot.lane.b32.xlu0 %v488, 4
      %v522 = vpop.permute.xlu0 %521
      %523 = vrot.lane.b32.xlu0 %v489, 4
      %v524 = vpop.permute.xlu0 %523
      %525 = vrot.lane.b32.xlu0 %v490, 4
      %v526 = vpop.permute.xlu0 %525
      %527 = vrot.lane.b32.xlu0 %v491, 4
      %v528 = vpop.permute.xlu0 %527
      %529 = vrot.lane.b32.xlu0 %v492, 4
      %v530 = vpop.permute.xlu0 %529
      %531 = vrot.lane.b32.xlu0 %v493, 4
      %v532 = vpop.permute.xlu0 %531
      %533 = vrot.lane.b32.xlu0 %v494, 4
      %v534 = vpop.permute.xlu0 %533
      %535 = vrot.lane.b32.xlu0 %v495, 4
      %v536 = vpop.permute.xlu0 %535
      %537 = vrot.lane.b32.xlu0 %v496, 4
      %v538 = vpop.permute.xlu0 %537
      %539 = vrot.lane.b32.xlu0 %v497, 4
      %v540 = vpop.permute.xlu0 %539
      %541 = vrot.lane.b32.xlu0 %v498, 4
      %v542 = vpop.permute.xlu0 %541
      %543 = vrot.lane.b32.xlu0 %v499, 4
      %v544 = vpop.permute.xlu0 %543
      %545 = vrot.lane.b32.xlu0 %v500, 4
      %v546 = vpop.permute.xlu0 %545
      %547 = vrot.lane.b32.xlu0 %v501, 4
      %v548 = vpop.permute.xlu0 %547
      %549 = vrot.lane.b32.xlu0 %v502, 4
      %v550 = vpop.permute.xlu0 %549
      %s567 = scalar_lea.vmem [#allocation2], 8
      %vm568 = vcmask 60448
      %569 = vst.msk [vmem:[%s567] sm:$0xf] %vm568, %v520
      %570 = vst.msk [vmem:[%s567 + $0x4] sm:$0xf] %vm568, %v522
      %571 = vst.msk [vmem:[%s567 + $0x8] sm:$0xf] %vm568, %v524
      %572 = vst.msk [vmem:[%s567 + $0xc] sm:$0xf] %vm568, %v526
      %573 = vst.msk [vmem:[%s567 + $0x10] sm:$0xf] %vm568, %v528
      %574 = vst.msk [vmem:[%s567 + $0x14] sm:$0xf] %vm568, %v530
      %575 = vst.msk [vmem:[%s567 + $0x18] sm:$0xf] %vm568, %v532
      %576 = vst.msk [vmem:[%s567 + $0x1c] sm:$0xf] %vm568, %v534
      %577 = vst.msk [vmem:[%s567 + $0x20] sm:$0xf] %vm568, %v536
      %578 = vst.msk [vmem:[%s567 + $0x24] sm:$0xf] %vm568, %v538
      %579 = vst.msk [vmem:[%s567 + $0x28] sm:$0xf] %vm568, %v540
      %580 = vst.msk [vmem:[%s567 + $0x2c] sm:$0xf] %vm568, %v542
      %581 = vst.msk [vmem:[%s567 + $0x30] sm:$0xf] %vm568, %v544
      %582 = vst.msk [vmem:[%s567 + $0x34] sm:$0xf] %vm568, %v546
      %583 = vst.msk [vmem:[%s567 + $0x38] sm:$0xf] %vm568, %v548
      %584 = vst.msk [vmem:[%s567 + $0x3c] sm:$0xf] %vm568, %v550
      %v585 = vld [vmem:[%s373] sm:$0xf]
      %v586 = vld [vmem:[%s373 + $0x4] sm:$0xf]
      %v587 = vld [vmem:[%s373 + $0x8] sm:$0xf]
      %v588 = vld [vmem:[%s373 + $0xc] sm:$0xf]
      %v589 = vld [vmem:[%s373 + $0x10] sm:$0xf]
      %v590 = vld [vmem:[%s373 + $0x14] sm:$0xf]
      %v591 = vld [vmem:[%s373 + $0x18] sm:$0xf]
      %v592 = vld [vmem:[%s373 + $0x1c] sm:$0xf]
      %v593 = vld [vmem:[%s373 + $0x20] sm:$0xf]
      %v594 = vld [vmem:[%s373 + $0x24] sm:$0xf]
      %v595 = vld [vmem:[%s373 + $0x28] sm:$0xf]
      %v596 = vld [vmem:[%s373 + $0x2c] sm:$0xf]
      %v597 = vld [vmem:[%s373 + $0x30] sm:$0xf]
      %v598 = vld [vmem:[%s373 + $0x34] sm:$0xf]
      %v599 = vld [vmem:[%s373 + $0x38] sm:$0xf]
      %v600 = vld [vmem:[%s373 + $0x3c] sm:$0xf]
      %vm601 = vsmask.f32 4368
      %vm602 = vmor %vm422, %vm601
      %v604 = vshrl.u32 %v585, 16
      %v606 = vrot.slane %v604, 7
      %v607 = vshll.u32 %v585, 16
      %v609 = vor.u32 %v606, %v607
      %v610 = vrot.slane %v606, 4
      %v612 = vshrl.u32 %v586, 16
      %v614 = vrot.slane %v612, 7
      %v615 = vshll.u32 %v586, 16
      %v617 = vor.u32 %v614, %v615
      %v618 = vsel %vm602, %v610, %v617
      %v620 = vshrl.u32 %v587, 16
      %v622 = vrot.slane %v620, 7
      %v623 = vshll.u32 %v587, 16
      %v625 = vor.u32 %v622, %v623
      %v626 = vrot.slane %v622, 4
      %v628 = vshrl.u32 %v588, 16
      %v630 = vrot.slane %v628, 7
      %v631 = vshll.u32 %v588, 16
      %v633 = vor.u32 %v630, %v631
      %v634 = vsel %vm602, %v626, %v633
      %v636 = vshrl.u32 %v589, 16
      %v638 = vrot.slane %v636, 7
      %v639 = vshll.u32 %v589, 16
      %v641 = vor.u32 %v638, %v639
      %v642 = vrot.slane %v638, 4
      %v644 = vshrl.u32 %v590, 16
      %v646 = vrot.slane %v644, 7
      %v647 = vshll.u32 %v590, 16
      %v649 = vor.u32 %v646, %v647
      %v650 = vsel %vm602, %v642, %v649
      %v652 = vshrl.u32 %v591, 16
      %v654 = vrot.slane %v652, 7
      %v655 = vshll.u32 %v591, 16
      %v657 = vor.u32 %v654, %v655
      %v658 = vrot.slane %v654, 4
      %v660 = vshrl.u32 %v592, 16
      %v662 = vrot.slane %v660, 7
      %v663 = vshll.u32 %v592, 16
      %v665 = vor.u32 %v662, %v663
      %v666 = vsel %vm602, %v658, %v665
      %v668 = vshrl.u32 %v593, 16
      %v670 = vrot.slane %v668, 7
      %v671 = vshll.u32 %v593, 16
      %v673 = vor.u32 %v670, %v671
      %v674 = vrot.slane %v670, 4
      %v676 = vshrl.u32 %v594, 16
      %v678 = vrot.slane %v676, 7
      %v679 = vshll.u32 %v594, 16
      %v681 = vor.u32 %v678, %v679
      %v682 = vsel %vm602, %v674, %v681
      %v684 = vshrl.u32 %v595, 16
      %v686 = vrot.slane %v684, 7
      %v687 = vshll.u32 %v595, 16
      %v689 = vor.u32 %v686, %v687
      %v690 = vrot.slane %v686, 4
      %v692 = vshrl.u32 %v596, 16
      %v694 = vrot.slane %v692, 7
      %v695 = vshll.u32 %v596, 16
      %v697 = vor.u32 %v694, %v695
      %v698 = vsel %vm602, %v690, %v697
      %v700 = vshrl.u32 %v597, 16
      %v702 = vrot.slane %v700, 7
      %v703 = vshll.u32 %v597, 16
      %v705 = vor.u32 %v702, %v703
      %v706 = vrot.slane %v702, 4
      %v708 = vshrl.u32 %v598, 16
      %v710 = vrot.slane %v708, 7
      %v711 = vshll.u32 %v598, 16
      %v713 = vor.u32 %v710, %v711
      %v714 = vsel %vm602, %v706, %v713
      %v716 = vshrl.u32 %v599, 16
      %v718 = vrot.slane %v716, 7
      %v719 = vshll.u32 %v599, 16
      %v721 = vor.u32 %v718, %v719
      %v722 = vrot.slane %v718, 4
      %v724 = vshrl.u32 %v600, 16
      %v726 = vrot.slane %v724, 7
      %v727 = vshll.u32 %v600, 16
      %v729 = vor.u32 %v726, %v727
      %v730 = vsel %vm602, %v722, %v729
      %vm747 = vcmask 27648
      %vm748 = vsmask.f32 7938
      %vm749 = vmand %vm747, %vm748
      %v750 = vld [vmem:[%s567] sm:$0xf]
      %v751 = vsel %vm749, %v609, %v750
      %752 = vst [vmem:[%s567] sm:$0xf] %v751
      %vm753 = vcmask 27648
      %754 = vst.msk [vmem:[%s567 + $0x4] sm:$0xf] %vm753, %v618
      %v755 = vld [vmem:[%s567 + $0x8] sm:$0xf]
      %v756 = vsel %vm749, %v625, %v755
      %757 = vst [vmem:[%s567 + $0x8] sm:$0xf] %v756
      %758 = vst.msk [vmem:[%s567 + $0xc] sm:$0xf] %vm753, %v634
      %v759 = vld [vmem:[%s567 + $0x10] sm:$0xf]
      %v760 = vsel %vm749, %v641, %v759
      %761 = vst [vmem:[%s567 + $0x10] sm:$0xf] %v760
      %762 = vst.msk [vmem:[%s567 + $0x14] sm:$0xf] %vm753, %v650
      %v763 = vld [vmem:[%s567 + $0x18] sm:$0xf]
      %v764 = vsel %vm749, %v657, %v763
      %765 = vst [vmem:[%s567 + $0x18] sm:$0xf] %v764
      %766 = vst.msk [vmem:[%s567 + $0x1c] sm:$0xf] %vm753, %v666
      %v767 = vld [vmem:[%s567 + $0x20] sm:$0xf]
      %v768 = vsel %vm749, %v673, %v767
      %769 = vst [vmem:[%s567 + $0x20] sm:$0xf] %v768
      %770 = vst.msk [vmem:[%s567 + $0x24] sm:$0xf] %vm753, %v682
      %v771 = vld [vmem:[%s567 + $0x28] sm:$0xf]
      %v772 = vsel %vm749, %v689, %v771
      %773 = vst [vmem:[%s567 + $0x28] sm:$0xf] %v772
      %774 = vst.msk [vmem:[%s567 + $0x2c] sm:$0xf] %vm753, %v698
      %v775 = vld [vmem:[%s567 + $0x30] sm:$0xf]
      %v776 = vsel %vm749, %v705, %v775
      %777 = vst [vmem:[%s567 + $0x30] sm:$0xf] %v776
      %778 = vst.msk [vmem:[%s567 + $0x34] sm:$0xf] %vm753, %v714
      %v779 = vld [vmem:[%s567 + $0x38] sm:$0xf]
      %v780 = vsel %vm749, %v721, %v779
      %781 = vst [vmem:[%s567 + $0x38] sm:$0xf] %v780
      %782 = vst.msk [vmem:[%s567 + $0x3c] sm:$0xf] %vm753, %v730
      %v783 = vld [vmem:[%s373] sm:$0xf]
      %v784 = vld [vmem:[%s373 + $0x4] sm:$0xf]
      %v785 = vld [vmem:[%s373 + $0x8] sm:$0xf]
      %v786 = vld [vmem:[%s373 + $0xc] sm:$0xf]
      %v787 = vld [vmem:[%s373 + $0x10] sm:$0xf]
      %v788 = vld [vmem:[%s373 + $0x14] sm:$0xf]
      %v789 = vld [vmem:[%s373 + $0x18] sm:$0xf]
      %v790 = vld [vmem:[%s373 + $0x1c] sm:$0xf]
      %v791 = vld [vmem:[%s373 + $0x20] sm:$0xf]
      %v792 = vld [vmem:[%s373 + $0x24] sm:$0xf]
      %v793 = vld [vmem:[%s373 + $0x28] sm:$0xf]
      %v794 = vld [vmem:[%s373 + $0x2c] sm:$0xf]
      %v795 = vld [vmem:[%s373 + $0x30] sm:$0xf]
      %v796 = vld [vmem:[%s373 + $0x34] sm:$0xf]
      %v797 = vld [vmem:[%s373 + $0x38] sm:$0xf]
      %v798 = vld [vmem:[%s373 + $0x3c] sm:$0xf]
      %vm799 = vsmask.f32 3328
      %vm800 = vsmask.f32 7440
      %vm801 = vmor %vm799, %vm800
      %v803 = vshrl.u32 %v783, 16
      %v805 = vrot.slane %v803, 4
      %v806 = vshll.u32 %v783, 16
      %v808 = vrot.slane %v806, 5
      %v809 = vor.u32 %v805, %v808
      %v810 = vrot.slane %v809, 4
      %v812 = vshll.u32 %v784, 16
      %v814 = vrot.slane %v812, 5
      %v815 = vsel %vm801, %v810, %v814
      %v816 = vshrl.u32 %v784, 16
      %v818 = vrot.slane %v816, 4
      %v819 = vor.u32 %v818, %v814
      %v820 = vrot.slane %v819, 4
      %v822 = vshrl.u32 %v785, 16
      %v824 = vrot.slane %v822, 4
      %v825 = vshll.u32 %v785, 16
      %v827 = vrot.slane %v825, 5
      %v828 = vor.u32 %v824, %v827
      %v829 = vrot.slane %v828, 4
      %v831 = vshll.u32 %v786, 16
      %v833 = vrot.slane %v831, 5
      %v834 = vsel %vm801, %v829, %v833
      %v835 = vshrl.u32 %v786, 16
      %v837 = vrot.slane %v835, 4
      %v838 = vor.u32 %v837, %v833
      %v839 = vrot.slane %v838, 4
      %v841 = vshrl.u32 %v787, 16
      %v843 = vrot.slane %v841, 4
      %v844 = vshll.u32 %v787, 16
      %v846 = vrot.slane %v844, 5
      %v847 = vor.u32 %v843, %v846
      %v848 = vrot.slane %v847, 4
      %v850 = vshll.u32 %v788, 16
      %v852 = vrot.slane %v850, 5
      %v853 = vsel %vm801, %v848, %v852
      %v854 = vshrl.u32 %v788, 16
      %v856 = vrot.slane %v854, 4
      %v857 = vor.u32 %v856, %v852
      %v858 = vrot.slane %v857, 4
      %v860 = vshrl.u32 %v789, 16
      %v862 = vrot.slane %v860, 4
      %v863 = vshll.u32 %v789, 16
      %v865 = vrot.slane %v863, 5
      %v866 = vor.u32 %v862, %v865
      %v867 = vrot.slane %v866, 4
      %v869 = vshll.u32 %v790, 16
      %v871 = vrot.slane %v869, 5
      %v872 = vsel %vm801, %v867, %v871
      %v873 = vshrl.u32 %v790, 16
      %v875 = vrot.slane %v873, 4
      %v876 = vor.u32 %v875, %v871
      %v877 = vrot.slane %v876, 4
      %v879 = vshrl.u32 %v791, 16
      %v881 = vrot.slane %v879, 4
      %v882 = vshll.u32 %v791, 16
      %v884 = vrot.slane %v882, 5
      %v885 = vor.u32 %v881, %v884
      %v886 = vrot.slane %v885, 4
      %v888 = vshll.u32 %v792, 16
      %v890 = vrot.slane %v888, 5
      %v891 = vsel %vm801, %v886, %v890
      %v892 = vshrl.u32 %v792, 16
      %v894 = vrot.slane %v892, 4
      %v895 = vor.u32 %v894, %v890
      %v896 = vrot.slane %v895, 4
      %v898 = vshrl.u32 %v793, 16
      %v900 = vrot.slane %v898, 4
      %v901 = vshll.u32 %v793, 16
      %v903 = vrot.slane %v901, 5
      %v904 = vor.u32 %v900, %v903
      %v905 = vrot.slane %v904, 4
      %v907 = vshll.u32 %v794, 16
      %v909 = vrot.slane %v907, 5
      %v910 = vsel %vm801, %v905, %v909
      %v911 = vshrl.u32 %v794, 16
      %v913 = vrot.slane %v911, 4
      %v914 = vor.u32 %v913, %v909
      %v915 = vrot.slane %v914, 4
      %v917 = vshrl.u32 %v795, 16
      %v919 = vrot.slane %v917, 4
      %v920 = vshll.u32 %v795, 16
      %v922 = vrot.slane %v920, 5
      %v923 = vor.u32 %v919, %v922
      %v924 = vrot.slane %v923, 4
      %v926 = vshll.u32 %v796, 16
      %v928 = vrot.slane %v926, 5
      %v929 = vsel %vm801, %v924, %v928
      %v930 = vshrl.u32 %v796, 16
      %v932 = vrot.slane %v930, 4
      %v933 = vor.u32 %v932, %v928
      %v934 = vrot.slane %v933, 4
      %v936 = vshrl.u32 %v797, 16
      %v938 = vrot.slane %v936, 4
      %v939 = vshll.u32 %v797, 16
      %v941 = vrot.slane %v939, 5
      %v942 = vor.u32 %v938, %v941
      %v943 = vrot.slane %v942, 4
      %v945 = vshll.u32 %v798, 16
      %v947 = vrot.slane %v945, 5
      %v948 = vsel %vm801, %v943, %v947
      %v949 = vshrl.u32 %v798, 16
      %v951 = vrot.slane %v949, 4
      %v952 = vor.u32 %v951, %v947
      %v953 = vrot.slane %v952, 4
      %954 = vrot.lane.b32.xlu0 %v815, 8
      %v955 = vpop.permute.xlu0 %954
      %956 = vrot.lane.b32.xlu0 %v820, 8
      %v957 = vpop.permute.xlu0 %956
      %958 = vrot.lane.b32.xlu0 %v834, 8
      %v959 = vpop.permute.xlu0 %958
      %960 = vrot.lane.b32.xlu0 %v839, 8
      %v961 = vpop.permute.xlu0 %960
      %962 = vrot.lane.b32.xlu0 %v853, 8
      %v963 = vpop.permute.xlu0 %962
      %964 = vrot.lane.b32.xlu0 %v858, 8
      %v965 = vpop.permute.xlu0 %964
      %966 = vrot.lane.b32.xlu0 %v872, 8
      %v967 = vpop.permute.xlu0 %966
      %968 = vrot.lane.b32.xlu0 %v877, 8
      %v969 = vpop.permute.xlu0 %968
      %970 = vrot.lane.b32.xlu0 %v891, 8
      %v971 = vpop.permute.xlu0 %970
      %972 = vrot.lane.b32.xlu0 %v896, 8
      %v973 = vpop.permute.xlu0 %972
      %974 = vrot.lane.b32.xlu0 %v910, 8
      %v975 = vpop.permute.xlu0 %974
      %976 = vrot.lane.b32.xlu0 %v915, 8
      %v977 = vpop.permute.xlu0 %976
      %978 = vrot.lane.b32.xlu0 %v929, 8
      %v979 = vpop.permute.xlu0 %978
      %980 = vrot.lane.b32.xlu0 %v934, 8
      %v981 = vpop.permute.xlu0 %980
      %982 = vrot.lane.b32.xlu0 %v948, 8
      %v983 = vpop.permute.xlu0 %982
      %984 = vrot.lane.b32.xlu0 %v953, 8
      %v985 = vpop.permute.xlu0 %984
      %vm1002 = vcmask 93248
      %1003 = vst.msk [vmem:[%s567] sm:$0xf] %vm1002, %v955
      %vm1004 = vcmask 93248
      %vm1005 = vmand %vm1004, %vm799
      %v1006 = vld [vmem:[%s567 + $0x4] sm:$0xf]
      %v1007 = vsel %vm1005, %v957, %v1006
      %1008 = vst [vmem:[%s567 + $0x4] sm:$0xf] %v1007
      %1009 = vst.msk [vmem:[%s567 + $0x8] sm:$0xf] %vm1002, %v959
      %v1010 = vld [vmem:[%s567 + $0xc] sm:$0xf]
      %v1011 = vsel %vm1005, %v961, %v1010
      %1012 = vst [vmem:[%s567 + $0xc] sm:$0xf] %v1011
      %1013 = vst.msk [vmem:[%s567 + $0x10] sm:$0xf] %vm1002, %v963
      %v1014 = vld [vmem:[%s567 + $0x14] sm:$0xf]
      %v1015 = vsel %vm1005, %v965, %v1014
      %1016 = vst [vmem:[%s567 + $0x14] sm:$0xf] %v1015
      %1017 = vst.msk [vmem:[%s567 + $0x18] sm:$0xf] %vm1002, %v967
      %v1018 = vld [vmem:[%s567 + $0x1c] sm:$0xf]
      %v1019 = vsel %vm1005, %v969, %v1018
      %1020 = vst [vmem:[%s567 + $0x1c] sm:$0xf] %v1019
      %1021 = vst.msk [vmem:[%s567 + $0x20] sm:$0xf] %vm1002, %v971
      %v1022 = vld [vmem:[%s567 + $0x24] sm:$0xf]
      %v1023 = vsel %vm1005, %v973, %v1022
      %1024 = vst [vmem:[%s567 + $0x24] sm:$0xf] %v1023
      %1025 = vst.msk [vmem:[%s567 + $0x28] sm:$0xf] %vm1002, %v975
      %v1026 = vld [vmem:[%s567 + $0x2c] sm:$0xf]
      %v1027 = vsel %vm1005, %v977, %v1026
      %1028 = vst [vmem:[%s567 + $0x2c] sm:$0xf] %v1027
      %1029 = vst.msk [vmem:[%s567 + $0x30] sm:$0xf] %vm1002, %v979
      %v1030 = vld [vmem:[%s567 + $0x34] sm:$0xf]
      %v1031 = vsel %vm1005, %v981, %v1030
      %1032 = vst [vmem:[%s567 + $0x34] sm:$0xf] %v1031
      %1033 = vst.msk [vmem:[%s567 + $0x38] sm:$0xf] %vm1002, %v983
      %v1034 = vld [vmem:[%s567 + $0x3c] sm:$0xf]
      %v1035 = vsel %vm1005, %v985, %v1034
      %1036 = vst [vmem:[%s567 + $0x3c] sm:$0xf] %v1035
      %p1037 = scmp.eq.s32.totalorder %s22, 0
      // Predicated region
      $region45: #{tpu_custom_call.1} parent=43 // pred_check
        %p1038 = pneg %p1037
      $region46: #{tpu_custom_call.1} parent=43 // pred_check_branch
        %1040 = sbr.rel (%p1038) target = $region48
      $region47: #{tpu_custom_call.1} parent=43 // pred_region
        %vm1041 = vcmask 93184
        %1042 = vst.msk [vmem:[#allocation2] sm:$0xf] %vm1041, 0
        %1043 = vst.msk [vmem:[#allocation2 + $0x4] sm:$0xf] %vm1041, 0
      $region48: #{tpu_custom_call.1} parent=43 // pred_fallthru
        _
      %p1044 = scmp.gt.s32.totalorder %s22, 0
      // Predicated region
      $region49: #{tpu_custom_call.1} parent=43 // pred_check
        %p1045 = pneg %p1044
      $region50: #{tpu_custom_call.1} parent=43 // pred_check_branch
        %1047 = sbr.rel (%p1045) target = $region52
      $region51: #{tpu_custom_call.1} parent=43 // pred_region
        %v1048 = vld [vmem:[%s387] sm:$0xf]
        %v1049 = vld [vmem:[%s387 + $0x4] sm:$0xf]
        %1052 = vrot.lane.b32.xlu0 %v1048, 4
        %v1053 = vpop.permute.xlu0 %1052
        %1054 = vrot.lane.b32.xlu0 %v1049, 4
        %v1055 = vpop.permute.xlu0 %1054
        %1058 = vst.msk [vmem:[#allocation2] sm:$0xf] %vm568, %v1053
        %1059 = vst.msk [vmem:[#allocation2 + $0x4] sm:$0xf] %vm568, %v1055
        %v1060 = vld [vmem:[%s387] sm:$0xf]
        %v1061 = vld [vmem:[%s387 + $0x4] sm:$0xf]
        %v1063 = vshrl.u32 %v1060, 16
        %v1065 = vrot.slane %v1063, 7
        %v1066 = vshll.u32 %v1060, 16
        %v1068 = vor.u32 %v1065, %v1066
        %v1069 = vrot.slane %v1065, 4
        %v1071 = vshrl.u32 %v1061, 16
        %v1073 = vrot.slane %v1071, 7
        %v1074 = vshll.u32 %v1061, 16
        %v1076 = vor.u32 %v1073, %v1074
        %v1077 = vsel %vm602, %v1069, %v1076
        %v1080 = vld [vmem:[#allocation2] sm:$0xf]
        %v1081 = vsel %vm749, %v1068, %v1080
        %1082 = vst [vmem:[#allocation2] sm:$0xf] %v1081
        %1083 = vst.msk [vmem:[#allocation2 + $0x4] sm:$0xf] %vm753, %v1077
        %v1084 = vld [vmem:[%s387] sm:$0xf]
        %v1085 = vld [vmem:[%s387 + $0x4] sm:$0xf]
        %v1087 = vshrl.u32 %v1084, 16
        %v1089 = vrot.slane %v1087, 4
        %v1090 = vshll.u32 %v1084, 16
        %v1092 = vrot.slane %v1090, 5
        %v1093 = vor.u32 %v1089, %v1092
        %v1094 = vrot.slane %v1093, 4
        %v1096 = vshll.u32 %v1085, 16
        %v1098 = vrot.slane %v1096, 5
        %v1099 = vsel %vm801, %v1094, %v1098
        %v1100 = vshrl.u32 %v1085, 16
        %v1102 = vrot.slane %v1100, 4
        %v1103 = vor.u32 %v1102, %v1098
        %v1104 = vrot.slane %v1103, 4
        %1105 = vrot.lane.b32.xlu0 %v1099, 8
        %v1106 = vpop.permute.xlu0 %1105
        %1107 = vrot.lane.b32.xlu0 %v1104, 8
        %v1108 = vpop.permute.xlu0 %1107
        %1111 = vst.msk [vmem:[#allocation2] sm:$0xf] %vm1002, %v1106
        %v1112 = vld [vmem:[#allocation2 + $0x4] sm:$0xf]
        %v1113 = vsel %vm1005, %v1108, %v1112
        %1114 = vst [vmem:[#allocation2 + $0x4] sm:$0xf] %v1113
      $region52: #{tpu_custom_call.1} parent=43 // pred_fallthru
        _
      %p1115 = scmp.eq.s32.totalorder %s22, 1
      // Predicated region
      $region53: #{tpu_custom_call.1} parent=43 // pred_check
        %p1116 = pneg %p1115
      $region54: #{tpu_custom_call.1} parent=43 // pred_check_branch
        %1118 = sbr.rel (%p1116) target = $region56
      $region55: #{tpu_custom_call.1} parent=43 // pred_region
        %s1119 = scalar_lea.vmem [#allocation2], 72
        %vm1120 = vcmask 93184
        %1121 = vst.msk [vmem:[%s1119] sm:$0xf] %vm1120, 0
        %1122 = vst.msk [vmem:[%s1119 + $0x4] sm:$0xf] %vm1120, 0
      $region56: #{tpu_custom_call.1} parent=43 // pred_fallthru
        _
      %p1123 = scmp.lt.s32.totalorder %s22, 1
      // Predicated region
      $region57: #{tpu_custom_call.1} parent=43 // pred_check
        %p1124 = pneg %p1123
      $region58: #{tpu_custom_call.1} parent=43 // pred_check_branch
        %1126 = sbr.rel (%p1124) target = $region60
      $region59: #{tpu_custom_call.1} parent=43 // pred_region
        %v1127 = vld [vmem:[%s404] sm:$0xf]
        %v1128 = vld [vmem:[%s404 + $0x4] sm:$0xf]
        %1131 = vrot.lane.b32.xlu0 %v1127, 4
        %v1132 = vpop.permute.xlu0 %1131
        %1133 = vrot.lane.b32.xlu0 %v1128, 4
        %v1134 = vpop.permute.xlu0 %1133
        %s1137 = scalar_lea.vmem [#allocation2], 72
        %1138 = vst.msk [vmem:[%s1137] sm:$0xf] %vm568, %v1132
        %1139 = vst.msk [vmem:[%s1137 + $0x4] sm:$0xf] %vm568, %v1134
        %v1140 = vld [vmem:[%s404] sm:$0xf]
        %v1141 = vld [vmem:[%s404 + $0x4] sm:$0xf]
        %v1143 = vshrl.u32 %v1140, 16
        %v1145 = vrot.slane %v1143, 7
        %v1146 = vshll.u32 %v1140, 16
        %v1148 = vor.u32 %v1145, %v1146
        %v1149 = vrot.slane %v1145, 4
        %v1151 = vshrl.u32 %v1141, 16
        %v1153 = vrot.slane %v1151, 7
        %v1154 = vshll.u32 %v1141, 16
        %v1156 = vor.u32 %v1153, %v1154
        %v1157 = vsel %vm602, %v1149, %v1156
        %v1160 = vld [vmem:[%s1137] sm:$0xf]
        %v1161 = vsel %vm749, %v1148, %v1160
        %1162 = vst [vmem:[%s1137] sm:$0xf] %v1161
        %1163 = vst.msk [vmem:[%s1137 + $0x4] sm:$0xf] %vm753, %v1157
        %v1164 = vld [vmem:[%s404] sm:$0xf]
        %v1165 = vld [vmem:[%s404 + $0x4] sm:$0xf]
        %v1167 = vshrl.u32 %v1164, 16
        %v1169 = vrot.slane %v1167, 4
        %v1170 = vshll.u32 %v1164, 16
        %v1172 = vrot.slane %v1170, 5
        %v1173 = vor.u32 %v1169, %v1172
        %v1174 = vrot.slane %v1173, 4
        %v1176 = vshll.u32 %v1165, 16
        %v1178 = vrot.slane %v1176, 5
        %v1179 = vsel %vm801, %v1174, %v1178
        %v1180 = vshrl.u32 %v1165, 16
        %v1182 = vrot.slane %v1180, 4
        %v1183 = vor.u32 %v1182, %v1178
        %v1184 = vrot.slane %v1183, 4
        %1185 = vrot.lane.b32.xlu0 %v1179, 8
        %v1186 = vpop.permute.xlu0 %1185
        %1187 = vrot.lane.b32.xlu0 %v1184, 8
        %v1188 = vpop.permute.xlu0 %1187
        %1191 = vst.msk [vmem:[%s1137] sm:$0xf] %vm1002, %v1186
        %v1192 = vld [vmem:[%s1137 + $0x4] sm:$0xf]
        %v1193 = vsel %vm1005, %v1188, %v1192
        %1194 = vst [vmem:[%s1137 + $0x4] sm:$0xf] %v1193
      $region60: #{tpu_custom_call.1} parent=43 // pred_fallthru
        _
      %v1195 = vld [vmem:[#allocation2] sm:$0xf]
      %v1196 = vld [vmem:[#allocation2 + $0x4] sm:$0xf]
      %v1197 = vld [vmem:[#allocation2 + $0x8] sm:$0xf]
      %v1198 = vld [vmem:[#allocation2 + $0xc] sm:$0xf]
      %v1199 = vld [vmem:[#allocation2 + $0x10] sm:$0xf]
      %v1200 = vld [vmem:[#allocation2 + $0x14] sm:$0xf]
      %v1201 = vld [vmem:[#allocation2 + $0x18] sm:$0xf]
      %v1202 = vld [vmem:[#allocation2 + $0x1c] sm:$0xf]
      %v1203 = vld [vmem:[#allocation2 + $0x20] sm:$0xf]
      %v1204 = vld [vmem:[#allocation2 + $0x24] sm:$0xf]
      %v1205 = vld [vmem:[#allocation2 + $0x28] sm:$0xf]
      %v1206 = vld [vmem:[#allocation2 + $0x2c] sm:$0xf]
      %v1207 = vld [vmem:[#allocation2 + $0x30] sm:$0xf]
      %v1208 = vld [vmem:[#allocation2 + $0x34] sm:$0xf]
      %v1209 = vld [vmem:[#allocation2 + $0x38] sm:$0xf]
      %v1210 = vld [vmem:[#allocation2 + $0x3c] sm:$0xf]
      %v1211 = vld [vmem:[%s3] sm:$0xf]
      %v1212 = vld [vmem:[%s3 + $0x4] sm:$0x3]
      %v1213 = vld [vmem:[%s567] sm:$0xf]
      %v1214 = vld [vmem:[%s567 + $0x4] sm:$0xf]
      %v1215 = vld [vmem:[%s567 + $0x8] sm:$0xf]
      %v1216 = vld [vmem:[%s567 + $0xc] sm:$0xf]
      %v1217 = vld [vmem:[%s567 + $0x10] sm:$0xf]
      %v1218 = vld [vmem:[%s567 + $0x14] sm:$0xf]
      %v1219 = vld [vmem:[%s567 + $0x18] sm:$0xf]
      %v1220 = vld [vmem:[%s567 + $0x1c] sm:$0xf]
      %v1221 = vld [vmem:[%s567 + $0x20] sm:$0xf]
      %v1222 = vld [vmem:[%s567 + $0x24] sm:$0xf]
      %v1223 = vld [vmem:[%s567 + $0x28] sm:$0xf]
      %v1224 = vld [vmem:[%s567 + $0x2c] sm:$0xf]
      %v1225 = vld [vmem:[%s567 + $0x30] sm:$0xf]
      %v1226 = vld [vmem:[%s567 + $0x34] sm:$0xf]
      %v1227 = vld [vmem:[%s567 + $0x38] sm:$0xf]
      %v1228 = vld [vmem:[%s567 + $0x3c] sm:$0xf]
      %v1229 = vld [vmem:[%s3 + $0x4] sm:$0xc]
      %v1230 = vld [vmem:[%s3 + $0x8] sm:$0xf]
      %v1247 = vunpack.c.l.b16 %v1213
      %v1248 = vunpack.c.l.b16 %v1214
      %v1249 = vunpack.c.l.b16 %v1215
      %v1250 = vunpack.c.l.b16 %v1216
      %v1251 = vunpack.c.l.b16 %v1217
      %v1252 = vunpack.c.l.b16 %v1218
      %v1253 = vunpack.c.l.b16 %v1219
      %v1254 = vunpack.c.l.b16 %v1220
      %v1255 = vunpack.c.l.b16 %v1221
      %v1256 = vunpack.c.l.b16 %v1222
      %v1257 = vunpack.c.l.b16 %v1223
      %v1258 = vunpack.c.l.b16 %v1224
      %v1259 = vunpack.c.l.b16 %v1225
      %v1260 = vunpack.c.l.b16 %v1226
      %v1261 = vunpack.c.l.b16 %v1227
      %v1262 = vunpack.c.l.b16 %v1228
      %v1263 = vpack.c.b16 %v1248, %v1247
      %v1264 = vpack.c.b16 %v1250, %v1249
      %v1265 = vpack.c.b16 %v1252, %v1251
      %v1266 = vpack.c.b16 %v1254, %v1253
      %v1267 = vpack.c.b16 %v1256, %v1255
      %v1268 = vpack.c.b16 %v1258, %v1257
      %v1269 = vpack.c.b16 %v1260, %v1259
      %v1270 = vpack.c.b16 %v1262, %v1261
      %v1273 = vunpack.c.l.b16 %v1229
      %v1274 = vunpack.c.l.b16 %v1230
      %v1275 = vpack.c.b16 %v1274, %v1273
      %v1276 = vrot.slane %v1275, 2
      %vm1277 = vcmask 97280
      %v1279 = vsel %vm1277, %v1263, 0
      %v1282 = vsel %vm1277, %v1264, 0
      %v1285 = vsel %vm1277, %v1265, 0
      %v1288 = vsel %vm1277, %v1266, 0
      %v1291 = vsel %vm1277, %v1267, 0
      %v1294 = vsel %vm1277, %v1268, 0
      %v1297 = vsel %vm1277, %v1269, 0
      %v1300 = vsel %vm1277, %v1270, 0
      %vm1302 = vcmask 1045504
      %v1304 = vsel %vm1302, %v1276, 0
      %1306 = vmatpush.bf16.msra.mxu0 0
      %1307 = vmatpush.bf16.msra.mxu0 0
      %1308 = vmatpush.bf16.msra.mxu0 0
      %1309 = vmatpush.bf16.msra.mxu0 0
      %1310 = vmatpush.bf16.msra.mxu0 0
      %1311 = vmatpush.bf16.msra.mxu0 0
      %1312 = vmatpush.bf16.msra.mxu0 0
      %1313 = vmatpush.bf16.msra.mxu0 %v1304
      %1314 = vmatmul.bf16.gmra.mxu0 %v1279
      %v1315 = vpop.f32.mrf.mxu0
      %v1316 = vadd.f32 0.0, %v1315
      %v1317 = vpop.f32.mrf.mxu0
      %v1318 = vadd.f32 0.0, %v1317
      %1319 = vmatmul.bf16.gmra.mxu0 %v1282
      %v1320 = vpop.f32.mrf.mxu0
      %v1321 = vadd.f32 0.0, %v1320
      %v1322 = vpop.f32.mrf.mxu0
      %v1323 = vadd.f32 0.0, %v1322
      %1324 = vmatmul.bf16.gmra.mxu0 %v1285
      %v1325 = vpop.f32.mrf.mxu0
      %v1326 = vadd.f32 0.0, %v1325
      %v1327 = vpop.f32.mrf.mxu0
      %v1328 = vadd.f32 0.0, %v1327
      %1329 = vmatmul.bf16.gmra.mxu0 %v1288
      %v1330 = vpop.f32.mrf.mxu0
      %v1331 = vadd.f32 0.0, %v1330
      %v1332 = vpop.f32.mrf.mxu0
      %v1333 = vadd.f32 0.0, %v1332
      %1334 = vmatmul.bf16.gmra.mxu0 %v1291
      %v1335 = vpop.f32.mrf.mxu0
      %v1336 = vadd.f32 0.0, %v1335
      %v1337 = vpop.f32.mrf.mxu0
      %v1338 = vadd.f32 0.0, %v1337
      %1339 = vmatmul.bf16.gmra.mxu0 %v1294
      %v1340 = vpop.f32.mrf.mxu0
      %v1341 = vadd.f32 0.0, %v1340
      %v1342 = vpop.f32.mrf.mxu0
      %v1343 = vadd.f32 0.0, %v1342
      %1344 = vmatmul.bf16.gmra.mxu0 %v1297
      %v1345 = vpop.f32.mrf.mxu0
      %v1346 = vadd.f32 0.0, %v1345
      %v1347 = vpop.f32.mrf.mxu0
      %v1348 = vadd.f32 0.0, %v1347
      %1349 = vmatmul.bf16.gmra.mxu0 %v1300
      %v1350 = vpop.f32.mrf.mxu0
      %v1351 = vadd.f32 0.0, %v1350
      %v1352 = vpop.f32.mrf.mxu0
      %v1353 = vadd.f32 0.0, %v1352
      %1354 = vdwg.mxu0
      %v1371 = vunpack.c.l.b16 %v1195
      %v1372 = vunpack.c.l.b16 %v1196
      %v1373 = vunpack.c.l.b16 %v1197
      %v1374 = vunpack.c.l.b16 %v1198
      %v1375 = vunpack.c.l.b16 %v1199
      %v1376 = vunpack.c.l.b16 %v1200
      %v1377 = vunpack.c.l.b16 %v1201
      %v1378 = vunpack.c.l.b16 %v1202
      %v1379 = vunpack.c.l.b16 %v1203
      %v1380 = vunpack.c.l.b16 %v1204
      %v1381 = vunpack.c.l.b16 %v1205
      %v1382 = vunpack.c.l.b16 %v1206
      %v1383 = vunpack.c.l.b16 %v1207
      %v1384 = vunpack.c.l.b16 %v1208
      %v1385 = vunpack.c.l.b16 %v1209
      %v1386 = vunpack.c.l.b16 %v1210
      %v1387 = vpack.c.b16 %v1372, %v1371
      %v1388 = vpack.c.b16 %v1374, %v1373
      %v1389 = vpack.c.b16 %v1376, %v1375
      %v1390 = vpack.c.b16 %v1378, %v1377
      %v1391 = vpack.c.b16 %v1380, %v1379
      %v1392 = vpack.c.b16 %v1382, %v1381
      %v1393 = vpack.c.b16 %v1384, %v1383
      %v1394 = vpack.c.b16 %v1386, %v1385
      %v1397 = vunpack.c.l.b16 %v1211
      %v1398 = vunpack.c.l.b16 %v1212
      %v1399 = vpack.c.b16 %v1398, %v1397
      %v1401 = vsel %vm1277, %v1387, 0
      %v1404 = vsel %vm1277, %v1388, 0
      %v1407 = vsel %vm1277, %v1389, 0
      %v1410 = vsel %vm1277, %v1390, 0
      %v1413 = vsel %vm1277, %v1391, 0
      %v1416 = vsel %vm1277, %v1392, 0
      %v1419 = vsel %vm1277, %v1393, 0
      %v1422 = vsel %vm1277, %v1394, 0
      %v1425 = vsel %vm1302, %v1399, 0
      %1427 = vmatpush.bf16.msra.mxu0 0
      %1428 = vmatpush.bf16.msra.mxu0 0
      %1429 = vmatpush.bf16.msra.mxu0 0
      %1430 = vmatpush.bf16.msra.mxu0 0
      %1431 = vmatpush.bf16.msra.mxu0 0
      %1432 = vmatpush.bf16.msra.mxu0 0
      %1433 = vmatpush.bf16.msra.mxu0 0
      %1434 = vmatpush.bf16.msra.mxu0 %v1425
      %1435 = vmatmul.bf16.gmra.mxu0 %v1401
      %v1436 = vpop.f32.mrf.mxu0
      %v1437 = vadd.f32 %v1316, %v1436
      %v1438 = vpop.f32.mrf.mxu0
      %v1439 = vadd.f32 %v1318, %v1438
      %1440 = vmatmul.bf16.gmra.mxu0 %v1404
      %v1441 = vpop.f32.mrf.mxu0
      %v1442 = vadd.f32 %v1321, %v1441
      %v1443 = vpop.f32.mrf.mxu0
      %v1444 = vadd.f32 %v1323, %v1443
      %1445 = vmatmul.bf16.gmra.mxu0 %v1407
      %v1446 = vpop.f32.mrf.mxu0
      %v1447 = vadd.f32 %v1326, %v1446
      %v1448 = vpop.f32.mrf.mxu0
      %v1449 = vadd.f32 %v1328, %v1448
      %1450 = vmatmul.bf16.gmra.mxu0 %v1410
      %v1451 = vpop.f32.mrf.mxu0
      %v1452 = vadd.f32 %v1331, %v1451
      %v1453 = vpop.f32.mrf.mxu0
      %v1454 = vadd.f32 %v1333, %v1453
      %1455 = vmatmul.bf16.gmra.mxu0 %v1413
      %v1456 = vpop.f32.mrf.mxu0
      %v1457 = vadd.f32 %v1336, %v1456
      %v1458 = vpop.f32.mrf.mxu0
      %v1459 = vadd.f32 %v1338, %v1458
      %1460 = vmatmul.bf16.gmra.mxu0 %v1416
      %v1461 = vpop.f32.mrf.mxu0
      %v1462 = vadd.f32 %v1341, %v1461
      %v1463 = vpop.f32.mrf.mxu0
      %v1464 = vadd.f32 %v1343, %v1463
      %1465 = vmatmul.bf16.gmra.mxu0 %v1419
      %v1466 = vpop.f32.mrf.mxu0
      %v1467 = vadd.f32 %v1346, %v1466
      %v1468 = vpop.f32.mrf.mxu0
      %v1469 = vadd.f32 %v1348, %v1468
      %1470 = vmatmul.bf16.gmra.mxu0 %v1422
      %v1471 = vpop.f32.mrf.mxu0
      %v1472 = vadd.f32 %v1351, %v1471
      %v1473 = vpop.f32.mrf.mxu0
      %v1474 = vadd.f32 %v1353, %v1473
      %1475 = vdwg.mxu0
      %s1476 = scalar_lea.vmem [#allocation2], 16
      %v1477 = vld [vmem:[%s1476] sm:$0xf]
      %v1478 = vld [vmem:[%s1476 + $0x4] sm:$0xf]
      %v1479 = vld [vmem:[%s1476 + $0x8] sm:$0xf]
      %v1480 = vld [vmem:[%s1476 + $0xc] sm:$0xf]
      %v1481 = vld [vmem:[%s1476 + $0x10] sm:$0xf]
      %v1482 = vld [vmem:[%s1476 + $0x14] sm:$0xf]
      %v1483 = vld [vmem:[%s1476 + $0x18] sm:$0xf]
      %v1484 = vld [vmem:[%s1476 + $0x1c] sm:$0xf]
      %v1485 = vld [vmem:[%s1476 + $0x20] sm:$0xf]
      %v1486 = vld [vmem:[%s1476 + $0x24] sm:$0xf]
      %v1487 = vld [vmem:[%s1476 + $0x28] sm:$0xf]
      %v1488 = vld [vmem:[%s1476 + $0x2c] sm:$0xf]
      %v1489 = vld [vmem:[%s1476 + $0x30] sm:$0xf]
      %v1490 = vld [vmem:[%s1476 + $0x34] sm:$0xf]
      %v1491 = vld [vmem:[%s1476 + $0x38] sm:$0xf]
      %v1492 = vld [vmem:[%s1476 + $0x3c] sm:$0xf]
      %v1493 = vld [vmem:[%s3 + $0xc] sm:$0xf]
      %v1494 = vld [vmem:[%s3 + $0x10] sm:$0x3]
      %v1511 = vunpack.c.l.b16 %v1477
      %v1512 = vunpack.c.l.b16 %v1478
      %v1513 = vunpack.c.l.b16 %v1479
      %v1514 = vunpack.c.l.b16 %v1480
      %v1515 = vunpack.c.l.b16 %v1481
      %v1516 = vunpack.c.l.b16 %v1482
      %v1517 = vunpack.c.l.b16 %v1483
      %v1518 = vunpack.c.l.b16 %v1484
      %v1519 = vunpack.c.l.b16 %v1485
      %v1520 = vunpack.c.l.b16 %v1486
      %v1521 = vunpack.c.l.b16 %v1487
      %v1522 = vunpack.c.l.b16 %v1488
      %v1523 = vunpack.c.l.b16 %v1489
      %v1524 = vunpack.c.l.b16 %v1490
      %v1525 = vunpack.c.l.b16 %v1491
      %v1526 = vunpack.c.l.b16 %v1492
      %v1527 = vpack.c.b16 %v1512, %v1511
      %v1528 = vpack.c.b16 %v1514, %v1513
      %v1529 = vpack.c.b16 %v1516, %v1515
      %v1530 = vpack.c.b16 %v1518, %v1517
      %v1531 = vpack.c.b16 %v1520, %v1519
      %v1532 = vpack.c.b16 %v1522, %v1521
      %v1533 = vpack.c.b16 %v1524, %v1523
      %v1534 = vpack.c.b16 %v1526, %v1525
      %v1537 = vunpack.c.l.b16 %v1493
      %v1538 = vunpack.c.l.b16 %v1494
      %v1539 = vpack.c.b16 %v1538, %v1537
      %v1541 = vsel %vm1277, %v1527, 0
      %v1544 = vsel %vm1277, %v1528, 0
      %v1547 = vsel %vm1277, %v1529, 0
      %v1550 = vsel %vm1277, %v1530, 0
      %v1553 = vsel %vm1277, %v1531, 0
      %v1556 = vsel %vm1277, %v1532, 0
      %v1559 = vsel %vm1277, %v1533, 0
      %v1562 = vsel %vm1277, %v1534, 0
      %v1565 = vsel %vm1302, %v1539, 0
      %1567 = vmatpush.bf16.msra.mxu0 0
      %1568 = vmatpush.bf16.msra.mxu0 0
      %1569 = vmatpush.bf16.msra.mxu0 0
      %1570 = vmatpush.bf16.msra.mxu0 0
      %1571 = vmatpush.bf16.msra.mxu0 0
      %1572 = vmatpush.bf16.msra.mxu0 0
      %1573 = vmatpush.bf16.msra.mxu0 0
      %1574 = vmatpush.bf16.msra.mxu0 %v1565
      %1575 = vmatmul.bf16.gmra.mxu0 %v1541
      %v1576 = vpop.f32.mrf.mxu0
      %v1577 = vadd.f32 0.0, %v1576
      %v1578 = vpop.f32.mrf.mxu0
      %v1579 = vadd.f32 0.0, %v1578
      %1580 = vmatmul.bf16.gmra.mxu0 %v1544
      %v1581 = vpop.f32.mrf.mxu0
      %v1582 = vadd.f32 0.0, %v1581
      %v1583 = vpop.f32.mrf.mxu0
      %v1584 = vadd.f32 0.0, %v1583
      %1585 = vmatmul.bf16.gmra.mxu0 %v1547
      %v1586 = vpop.f32.mrf.mxu0
      %v1587 = vadd.f32 0.0, %v1586
      %v1588 = vpop.f32.mrf.mxu0
      %v1589 = vadd.f32 0.0, %v1588
      %1590 = vmatmul.bf16.gmra.mxu0 %v1550
      %v1591 = vpop.f32.mrf.mxu0
      %v1592 = vadd.f32 0.0, %v1591
      %v1593 = vpop.f32.mrf.mxu0
      %v1594 = vadd.f32 0.0, %v1593
      %1595 = vmatmul.bf16.gmra.mxu0 %v1553
      %v1596 = vpop.f32.mrf.mxu0
      %v1597 = vadd.f32 0.0, %v1596
      %v1598 = vpop.f32.mrf.mxu0
      %v1599 = vadd.f32 0.0, %v1598
      %1600 = vmatmul.bf16.gmra.mxu0 %v1556
      %v1601 = vpop.f32.mrf.mxu0
      %v1602 = vadd.f32 0.0, %v1601
      %v1603 = vpop.f32.mrf.mxu0
      %v1604 = vadd.f32 0.0, %v1603
      %1605 = vmatmul.bf16.gmra.mxu0 %v1559
      %v1606 = vpop.f32.mrf.mxu0
      %v1607 = vadd.f32 0.0, %v1606
      %v1608 = vpop.f32.mrf.mxu0
      %v1609 = vadd.f32 0.0, %v1608
      %1610 = vmatmul.bf16.gmra.mxu0 %v1562
      %v1611 = vpop.f32.mrf.mxu0
      %v1612 = vadd.f32 0.0, %v1611
      %v1613 = vpop.f32.mrf.mxu0
      %v1614 = vadd.f32 0.0, %v1613
      %1615 = vdwg.mxu0
      %v1616 = vadd.f32 %v1437, %v1577
      %v1617 = vadd.f32 %v1439, %v1579
      %v1618 = vadd.f32 %v1442, %v1582
      %v1619 = vadd.f32 %v1444, %v1584
      %v1620 = vadd.f32 %v1447, %v1587
      %v1621 = vadd.f32 %v1449, %v1589
      %v1622 = vadd.f32 %v1452, %v1592
      %v1623 = vadd.f32 %v1454, %v1594
      %v1624 = vadd.f32 %v1457, %v1597
      %v1625 = vadd.f32 %v1459, %v1599
      %v1626 = vadd.f32 %v1462, %v1602
      %v1627 = vadd.f32 %v1464, %v1604
      %v1628 = vadd.f32 %v1467, %v1607
      %v1629 = vadd.f32 %v1469, %v1609
      %v1630 = vadd.f32 %v1472, %v1612
      %v1631 = vadd.f32 %v1474, %v1614
      %v1632 = vld [vmem:[%s4] sm:$0x1]
      %v1634 = vperm.slane %v1632, 0
      %v1636 = vmul.f32 %v1616, %v1634
      %v1637 = vmul.f32 %v1617, %v1634
      %v1638 = vmul.f32 %v1618, %v1634
      %v1639 = vmul.f32 %v1619, %v1634
      %v1640 = vmul.f32 %v1620, %v1634
      %v1641 = vmul.f32 %v1621, %v1634
      %v1642 = vmul.f32 %v1622, %v1634
      %v1643 = vmul.f32 %v1623, %v1634
      %v1644 = vmul.f32 %v1624, %v1634
      %v1645 = vmul.f32 %v1625, %v1634
      %v1646 = vmul.f32 %v1626, %v1634
      %v1647 = vmul.f32 %v1627, %v1634
      %v1648 = vmul.f32 %v1628, %v1634
      %v1649 = vmul.f32 %v1629, %v1634
      %v1650 = vmul.f32 %v1630, %v1634
      %v1651 = vmul.f32 %v1631, %v1634
      %v1652 = vld [vmem:[%s5] sm:$0x1]
      %v1654 = vperm.slane %v1652, 0
      %v1656 = vadd.f32 %v1636, %v1654
      %v1657 = vadd.f32 %v1637, %v1654
      %v1658 = vadd.f32 %v1638, %v1654
      %v1659 = vadd.f32 %v1639, %v1654
      %v1660 = vadd.f32 %v1640, %v1654
      %v1661 = vadd.f32 %v1641, %v1654
      %v1662 = vadd.f32 %v1642, %v1654
      %v1663 = vadd.f32 %v1643, %v1654
      %v1664 = vadd.f32 %v1644, %v1654
      %v1665 = vadd.f32 %v1645, %v1654
      %v1666 = vadd.f32 %v1646, %v1654
      %v1667 = vadd.f32 %v1647, %v1654
      %v1668 = vadd.f32 %v1648, %v1654
      %v1669 = vadd.f32 %v1649, %v1654
      %v1670 = vadd.f32 %v1650, %v1654
      %v1671 = vadd.f32 %v1651, %v1654
      %v1672 = vmax.f32 %v1656, 0.0
      %v1673 = vmax.f32 %v1657, 0.0
      %v1674 = vmax.f32 %v1658, 0.0
      %v1675 = vmax.f32 %v1659, 0.0
      %v1676 = vmax.f32 %v1660, 0.0
      %v1677 = vmax.f32 %v1661, 0.0
      %v1678 = vmax.f32 %v1662, 0.0
      %v1679 = vmax.f32 %v1663, 0.0
      %v1680 = vmax.f32 %v1664, 0.0
      %v1681 = vmax.f32 %v1665, 0.0
      %v1682 = vmax.f32 %v1666, 0.0
      %v1683 = vmax.f32 %v1667, 0.0
      %v1684 = vmax.f32 %v1668, 0.0
      %v1685 = vmax.f32 %v1669, 0.0
      %v1686 = vmax.f32 %v1670, 0.0
      %v1687 = vmax.f32 %v1671, 0.0
      %v1688 = vld [vmem:[%s373] sm:$0xf]
      %v1689 = vld [vmem:[%s373 + $0x4] sm:$0xf]
      %v1690 = vld [vmem:[%s373 + $0x8] sm:$0xf]
      %v1691 = vld [vmem:[%s373 + $0xc] sm:$0xf]
      %v1692 = vld [vmem:[%s373 + $0x10] sm:$0xf]
      %v1693 = vld [vmem:[%s373 + $0x14] sm:$0xf]
      %v1694 = vld [vmem:[%s373 + $0x18] sm:$0xf]
      %v1695 = vld [vmem:[%s373 + $0x1c] sm:$0xf]
      %v1696 = vld [vmem:[%s373 + $0x20] sm:$0xf]
      %v1697 = vld [vmem:[%s373 + $0x24] sm:$0xf]
      %v1698 = vld [vmem:[%s373 + $0x28] sm:$0xf]
      %v1699 = vld [vmem:[%s373 + $0x2c] sm:$0xf]
      %v1700 = vld [vmem:[%s373 + $0x30] sm:$0xf]
      %v1701 = vld [vmem:[%s373 + $0x34] sm:$0xf]
      %v1702 = vld [vmem:[%s373 + $0x38] sm:$0xf]
      %v1703 = vld [vmem:[%s373 + $0x3c] sm:$0xf]
      %v1704 = vunpack.c.l.bf16 %v1688
      %v1705 = vunpack.c.l.bf16 %v1689
      %v1706 = vunpack.c.l.bf16 %v1690
      %v1707 = vunpack.c.l.bf16 %v1691
      %v1708 = vunpack.c.l.bf16 %v1692
      %v1709 = vunpack.c.l.bf16 %v1693
      %v1710 = vunpack.c.l.bf16 %v1694
      %v1711 = vunpack.c.l.bf16 %v1695
      %v1712 = vunpack.c.l.bf16 %v1696
      %v1713 = vunpack.c.l.bf16 %v1697
      %v1714 = vunpack.c.l.bf16 %v1698
      %v1715 = vunpack.c.l.bf16 %v1699
      %v1716 = vunpack.c.l.bf16 %v1700
      %v1717 = vunpack.c.l.bf16 %v1701
      %v1718 = vunpack.c.l.bf16 %v1702
      %v1719 = vunpack.c.l.bf16 %v1703
      %v1720 = vadd.f32 %v1704, %v1672
      %v1721 = vadd.f32 %v1705, %v1673
      %v1722 = vadd.f32 %v1706, %v1674
      %v1723 = vadd.f32 %v1707, %v1675
      %v1724 = vadd.f32 %v1708, %v1676
      %v1725 = vadd.f32 %v1709, %v1677
      %v1726 = vadd.f32 %v1710, %v1678
      %v1727 = vadd.f32 %v1711, %v1679
      %v1728 = vadd.f32 %v1712, %v1680
      %v1729 = vadd.f32 %v1713, %v1681
      %v1730 = vadd.f32 %v1714, %v1682
      %v1731 = vadd.f32 %v1715, %v1683
      %v1732 = vadd.f32 %v1716, %v1684
      %v1733 = vadd.f32 %v1717, %v1685
      %v1734 = vadd.f32 %v1718, %v1686
      %v1735 = vadd.f32 %v1719, %v1687
      %v1736 = vpack.c.bf16 %v1720, %v1720
      %v1737 = vpack.c.bf16 %v1721, %v1721
      %v1738 = vpack.c.bf16 %v1722, %v1722
      %v1739 = vpack.c.bf16 %v1723, %v1723
      %v1740 = vpack.c.bf16 %v1724, %v1724
      %v1741 = vpack.c.bf16 %v1725, %v1725
      %v1742 = vpack.c.bf16 %v1726, %v1726
      %v1743 = vpack.c.bf16 %v1727, %v1727
      %v1744 = vpack.c.bf16 %v1728, %v1728
      %v1745 = vpack.c.bf16 %v1729, %v1729
      %v1746 = vpack.c.bf16 %v1730, %v1730
      %v1747 = vpack.c.bf16 %v1731, %v1731
      %v1748 = vpack.c.bf16 %v1732, %v1732
      %v1749 = vpack.c.bf16 %v1733, %v1733
      %v1750 = vpack.c.bf16 %v1734, %v1734
      %v1751 = vpack.c.bf16 %v1735, %v1735
      %1752 = vst.msk [vmem:[%s418] sm:$0xf] %vm753, %v1736
      %1753 = vst.msk [vmem:[%s418 + $0x4] sm:$0xf] %vm753, %v1737
      %1754 = vst.msk [vmem:[%s418 + $0x8] sm:$0xf] %vm753, %v1738
      %1755 = vst.msk [vmem:[%s418 + $0xc] sm:$0xf] %vm753, %v1739
      %1756 = vst.msk [vmem:[%s418 + $0x10] sm:$0xf] %vm753, %v1740
      %1757 = vst.msk [vmem:[%s418 + $0x14] sm:$0xf] %vm753, %v1741
      %1758 = vst.msk [vmem:[%s418 + $0x18] sm:$0xf] %vm753, %v1742
      %1759 = vst.msk [vmem:[%s418 + $0x1c] sm:$0xf] %vm753, %v1743
      %1760 = vst.msk [vmem:[%s418 + $0x20] sm:$0xf] %vm753, %v1744
      %1761 = vst.msk [vmem:[%s418 + $0x24] sm:$0xf] %vm753, %v1745
      %1762 = vst.msk [vmem:[%s418 + $0x28] sm:$0xf] %vm753, %v1746
      %1763 = vst.msk [vmem:[%s418 + $0x2c] sm:$0xf] %vm753, %v1747
      %1764 = vst.msk [vmem:[%s418 + $0x30] sm:$0xf] %vm753, %v1748
      %1765 = vst.msk [vmem:[%s418 + $0x34] sm:$0xf] %vm753, %v1749
      %1766 = vst.msk [vmem:[%s418 + $0x38] sm:$0xf] %vm753, %v1750
      %1767 = vst.msk [vmem:[%s418 + $0x3c] sm:$0xf] %vm753, %v1751
      %s1768 = smul.u32 8, %s22
      %p1769 = scmp.lt.s32.totalorder %s21, 1
      %s1770 = scalar_select %p1769, %s21, 1
      %p1771 = scmp.lt.s32.totalorder %s1768, 15
      %s1772 = scalar_select %p1771, %s1768, 15
      %s1773 = smul.addr %s1772, 2
      %s1774 = smul.addr %s1770, 32
      %s1775 = sadd.s32 %s1773, %s1774
      %s1776 = smul.addr %s1775, 4
      %s1777 = scalar_lea.vmem %s6, %s1776
      // Predicated region
      $region61: #{tpu_custom_call.1} parent=43 // pred_check
        %p1778 = pneg %p212
      $region62: #{tpu_custom_call.1} parent=43 // pred_check_branch
        %1780 = sbr.rel (%p1778) target = $region64
      $region63: #{tpu_custom_call.1} parent=43 // pred_region
        %s1781 = smul.u32 8, %s22
      $region64: #{tpu_custom_call.1} parent=43 // pred_fallthru
        _
    $region44: #{tpu_custom_call.1} parent=5 // pred_fallthru
      _
    %p1782 = scmp.le.s32.totalorder 2, %s12
    // Predicated region
    $region65: #{tpu_custom_call.1} parent=5 // pred_check
      %p1783 = pneg %p1782
    $region66: #{tpu_custom_call.1} parent=5 // pred_check_branch
      %1785 = sbr.rel (%p1783) target = $region68
    $region67: #{tpu_custom_call.1} parent=5 // pred_region
      %s1786 = ssub.s32 %s12, 2
      // Predicated region
      $region69: #{tpu_custom_call.1} parent=67 // pred_check
        %p1787 = pneg %p218
      $region70: #{tpu_custom_call.1} parent=67 // pred_check_branch
        %1789 = sbr.rel (%p1787) target = $region72
      $region71: #{tpu_custom_call.1} parent=67 // pred_region
        %s1790 = smul.u32 8, %s24
        %p1791 = scmp.lt.s32.totalorder %s23, 1
        %s1792 = scalar_select %p1791, %s23, 1
        %p1793 = scmp.lt.s32.totalorder %s1790, 15
        %s1794 = scalar_select %p1793, %s1790, 15
        %s1795 = smul.addr %s1794, 2
        %s1796 = smul.addr %s1792, 32
        %s1797 = sadd.s32 %s1795, %s1796
        %s1798 = smul.addr %s1797, 4
        %s1799 = scalar_lea.vmem %s6, %s1798
      $region72: #{tpu_custom_call.1} parent=67 // pred_fallthru
        _
    $region68: #{tpu_custom_call.1} parent=5 // pred_fallthru
      _
  $region6: #{tpu_custom_call.1} parent=0 // loop_footer
    %s16 = sadd.s32 1, %s12
  $region7: #{tpu_custom_call.1} parent=0 // loop_footer_branch
    %11 = sbr.rel target = $region3
  $region8: #{tpu_custom_call.1} parent=0 // loop_exit
    _

</llo_original>
